<compile_context>
chip_gen: v6e
topology: v6e:2x2x1
jax: 0.10.0
libtpu: 0.0.40
codegen_flags: <defaults>
</compile_context>

<pallas_src>
import math

import jax
import jax.numpy as jnp
import numpy as np
from jax import lax
from jax.experimental import pallas as pl
from jax.experimental.pallas import tpu as pltpu

D_IN = 300          # GloVe embedding size
HIDDEN = 20         # LSTM hidden size per direction
D_PAD = 384         # 300 padded up to a multiple of 128 (lane-aligned K)


# ----------------------------------------------------------------------------
# Pallas kernel
# ----------------------------------------------------------------------------
def rnn_classifier_kernel(
    x_ref,      # (T, 2*D_PAD) f32 : [feat | reversed(feat)], zero padded
    wih_ref,    # (2*D_PAD, 8H) f32 : block-diag per-gate input weights
    whh_ref,    # (2H, 8H)      f32 : block-diag per-gate recurrent weights
    b_ref,      # (1, 8H)       f32 : b_ih + b_hh, both directions
    wfc_ref,    # (1, 2H)       f32 : final linear weight (fwd | bwd halves)
    bfc_ref,    # (1, 1)        f32
    out_ref,    # (1, 1)        f32
    xp_ref,     # scratch (T, 8H) f32 : precomputed input projections
):
    T = x_ref.shape[0]
    H2 = whh_ref.shape[0]          # 2H = 40  (both directions)
    H3 = 3 * H2                    # 120      (sigmoid slab: i|f|o, both dirs)

    # ---- Phase 1: all input projections for all gates/dirs, one MXU call ----
    xp_ref[...] = (
        jnp.dot(x_ref[...], wih_ref[...], preferred_element_type=jnp.float32)
        + b_ref[...]
    )

    whh = whh_ref[...]             # (2H, 8H), hoisted out of the time loop
    wfc = wfc_ref[...]             # (1, 2H)

    # ---- Phase 2: fused bidirectional recurrence ----------------------------
    # Combined state layout: [:, 0:H] = forward dir, [:, H:2H] = backward dir.
    # Step t consumes feat[t] (fwd half of the xp row) and feat[T-1-t] (bwd
    # half, pre-reversed on the host), which is valid because the max-pool
    # over time is order independent.
    def step(t, carry):
        h, c, pool = carry
        gates = xp_ref[pl.ds(t, 1), :] + jnp.dot(
            h, whh, preferred_element_type=jnp.float32)           # (1, 8H)
        sig = jax.nn.sigmoid(gates[:, :H3])                        # (1, 6H)
        g = jnp.tanh(gates[:, H3:])                                # (1, 2H)
        i = sig[:, 0:H2]
        f = sig[:, H2:2 * H2]
        o = sig[:, 2 * H2:H3]
        c = f * c + i * g
        h = o * jnp.tanh(c)
        pool = jnp.maximum(pool, h)
        return h, c, pool

    h0 = jnp.zeros((1, H2), jnp.float32)
    c0 = jnp.zeros((1, H2), jnp.float32)
    p0 = jnp.full((1, H2), -jnp.inf, jnp.float32)
    # TODO(synk): T == 0 (empty sentence) would propagate -inf through the
    # pool; torch.max over an empty dim errors too, so it is not handled.
    _, _, pool = lax.fori_loop(0, T, step, (h0, c0, p0), unroll=min(T, 8))

    # ---- Phase 3: Linear(2H -> 1) + sigmoid as VPU mul + lane reduce --------
    logit = jnp.sum(pool * wfc, axis=1, keepdims=True) + bfc_ref[...]
    out_ref[...] = jax.nn.sigmoid(logit)


# ----------------------------------------------------------------------------
# Parameter construction (deterministic, torch layout)
# ----------------------------------------------------------------------------
def init_params(key, d_in=D_IN, hidden=HIDDEN):
    """Parameters in PyTorch layout (nn.LSTM / nn.Linear conventions)."""
    ks = jax.random.split(key, 10)
    s = 1.0 / math.sqrt(hidden)

    def u(k, shape):
        return jax.random.uniform(k, shape, jnp.float32, -s, s)

    return dict(
        w_ih_f=u(ks[0], (4 * hidden, d_in)),
        w_hh_f=u(ks[1], (4 * hidden, hidden)),
        b_ih_f=u(ks[2], (4 * hidden,)),
        b_hh_f=u(ks[3], (4 * hidden,)),
        w_ih_b=u(ks[4], (4 * hidden, d_in)),
        w_hh_b=u(ks[5], (4 * hidden, hidden)),
        b_ih_b=u(ks[6], (4 * hidden,)),
        b_hh_b=u(ks[7], (4 * hidden,)),
        w_fc=u(ks[8], (1, 2 * hidden)),
        b_fc=u(ks[9], (1,)),
    )


# ----------------------------------------------------------------------------
# Host-side weight repacking into the fused kernel layout
# ----------------------------------------------------------------------------
# Gate column layout (width 8H = 160):
#   [ i_f | i_b | f_f | f_b | o_f | o_b | g_f | g_b ]   (each chunk = H = 20)
# so sigmoid gates occupy cols [0, 6H) and the tanh gate cols [6H, 8H).
_GATE_BLOCK = {0: 0, 1: 1, 3: 2, 2: 3}   # torch gate idx (i,f,g,o) -> column block


def prep_kernel_params(p, hidden=HIDDEN, d_in=D_IN, d_pad=D_PAD):
    H = hidden
    wih = jnp.zeros((2 * d_pad, 8 * H), jnp.float32)
    whh = jnp.zeros((2 * H, 8 * H), jnp.float32)
    bias = jnp.zeros((1, 8 * H), jnp.float32)

    dirs = [
        (p["w_ih_f"], p["w_hh_f"], p["b_ih_f"], p["b_hh_f"]),
        (p["w_ih_b"], p["w_hh_b"], p["b_ih_b"], p["b_hh_b"]),
    ]
    for d, (wi, wh, bi, bh) in enumerate(dirs):
        xrow0 = d * d_pad          # lane offset of this direction in x_both
        hrow0 = d * H              # lane offset of this direction in h_comb
        for tg in range(4):        # torch gate index (i, f, g, o)
            c0 = _GATE_BLOCK[tg] * 2 * H + d * H
            wih = wih.at[xrow0:xrow0 + d_in, c0:c0 + H].set(
                wi[tg * H:(tg + 1) * H, :].T)
            whh = whh.at[hrow0:hrow0 + H, c0:c0 + H].set(
                wh[tg * H:(tg + 1) * H, :].T)
            bias = bias.at[0, c0:c0 + H].set(
                bi[tg * H:(tg + 1) * H] + bh[tg * H:(tg + 1) * H])

    wfc = p["w_fc"].astype(jnp.float32)            # (1, 2H): [fwd | bwd]
    bfc = p["b_fc"].reshape(1, 1).astype(jnp.float32)
    return wih, whh, bias, wfc, bfc


# ----------------------------------------------------------------------------
# Wrapper around pallas_call
# ----------------------------------------------------------------------------
def rnn_classifier_forward(feat, params):
    """feat: (T, 300) f32 -> (1, 1) f32 sigmoid output (matches torch forward)."""
    T, d_in = feat.shape
    wih, whh, bias, wfc, bfc = prep_kernel_params(params)

    # Host-side prep: pad K to a lane-aligned 384 per direction and append a
    # time-reversed copy so the kernel's single fused loop serves both dirs.
    feat = feat.astype(jnp.float32)
    pad = jnp.zeros((T, D_PAD - d_in), jnp.float32)
    x_f = jnp.concatenate([feat, pad], axis=1)          # (T, 384)
    x_b = jnp.concatenate([feat[::-1], pad], axis=1)    # (T, 384)
    x_both = jnp.concatenate([x_f, x_b], axis=1)        # (T, 768)

    return pl.pallas_call(
        rnn_classifier_kernel,
        out_shape=jax.ShapeDtypeStruct((1, 1), jnp.float32),
        in_specs=[pl.BlockSpec(memory_space=pltpu.MemorySpace.VMEM)] * 6,
        out_specs=pl.BlockSpec(memory_space=pltpu.MemorySpace.VMEM),
        scratch_shapes=[pltpu.VMEM((T, 8 * HIDDEN), jnp.float32)],
    )(x_both, wih, whh, bias, wfc, bfc)


# ----------------------------------------------------------------------------
# Pure-JAX reference (mirrors torch nn.LSTM + max + Linear + sigmoid)
# ----------------------------------------------------------------------------
def reference_forward(feat, p, hidden=HIDDEN):
    def lstm_dir(x, w_ih, w_hh, b_ih, b_hh, reverse):
        T = x.shape[0]
        h = jnp.zeros((hidden,), jnp.float32)
        c = jnp.zeros((hidden,), jnp.float32)
        outs = []
        idxs = range(T - 1, -1, -1) if reverse else range(T)
        for t in idxs:
            gates = w_ih @ x[t] + b_ih + w_hh @ h + b_hh
            i = jax.nn.sigmoid(gates[0:hidden])
            f = jax.nn.sigmoid(gates[hidden:2 * hidden])
            g = jnp.tanh(gates[2 * hidden:3 * hidden])
            o = jax.nn.sigmoid(gates[3 * hidden:4 * hidden])
            c = f * c + i * g
            h = o * jnp.tanh(c)
            outs.append(h)
        if reverse:
            outs = outs[::-1]
        return jnp.stack(outs)  # (T, H)

    hf = lstm_dir(feat, p["w_ih_f"], p["w_hh_f"], p["b_ih_f"], p["b_hh_f"], False)
    hb = lstm_dir(feat, p["w_ih_b"], p["w_hh_b"], p["b_ih_b"], p["b_hh_b"], True)
    lstm_out = jnp.concatenate([hf, hb], axis=-1)          # (T, 2H)
    pool = jnp.max(lstm_out, axis=0, keepdims=True)        # (1, 2H)
    logit = pool @ p["w_fc"].T + p["b_fc"]                 # (1, 1)
    return jax.nn.sigmoid(logit)


# TODO(synk): GloVe embedding lookup (featurize) has no in-kernel equivalent;
# the kernel starts from the already-embedded feature matrix, like forward().

if __name__ == "__main__":
    key = jax.random.PRNGKey(0)
    k_feat, k_param = jax.random.split(key)

    T = 8  # sequence length (number of words)
    feat = jax.random.normal(k_feat, (T, D_IN), jnp.float32)
    params = init_params(k_param)

    out = rnn_classifier_forward(feat, params)
    out = jax.block_until_ready(out)

    ref = reference_forward(feat, params)
    assert out.shape == (1, 1) and out.dtype == jnp.float32
    np.testing.assert_allclose(np.asarray(out), np.asarray(ref), rtol=2e-5, atol=2e-5)

    print("KERNEL_OK")
</pallas_src>

<mosaic_0001>
module attributes {stable_mosaic.version = 11 : i64} {
  func.func @rnn_classifier_kernel(%arg0: memref<8x768xf32, #tpu.memory_space<vmem>>, %arg1: memref<768x160xf32, #tpu.memory_space<vmem>>, %arg2: memref<40x160xf32, #tpu.memory_space<vmem>>, %arg3: memref<1x160xf32, #tpu.memory_space<vmem>>, %arg4: memref<1x40xf32, #tpu.memory_space<vmem>>, %arg5: memref<1x1xf32, #tpu.memory_space<vmem>>, %arg6: memref<1x1xf32, #tpu.memory_space<vmem>>, %arg7: memref<8x160xf32, #tpu.memory_space<vmem>>) attributes {dimension_semantics = [], scalar_prefetch = 0 : i64, scratch_operands = 1 : i64, tpu.core_type = #tpu.core_type<tc>} {
    %c0 = arith.constant 0 : index
    %c0_0 = arith.constant 0 : index
    %0 = vector.load %arg0[%c0, %c0_0] : memref<8x768xf32, #tpu.memory_space<vmem>>, vector<8x768xf32>
    %c0_1 = arith.constant 0 : index
    %c0_2 = arith.constant 0 : index
    %1 = vector.load %arg1[%c0_1, %c0_2] : memref<768x160xf32, #tpu.memory_space<vmem>>, vector<768x160xf32>
    %cst = arith.constant dense<0.000000e+00> : vector<8x160xf32>
    %2 = tpu.matmul %0, %1, %cst {dimension_numbers = #tpu.dot_dimension_numbers<[1], [0], [0], [1], [0, 0, 1, 1], [], []>} : vector<8x768xf32>, vector<768x160xf32>, vector<8x160xf32> -> vector<8x160xf32>
    %c0_3 = arith.constant 0 : index
    %c0_4 = arith.constant 0 : index
    %3 = vector.load %arg3[%c0_3, %c0_4] : memref<1x160xf32, #tpu.memory_space<vmem>>, vector<1x160xf32>
    %4 = vector.broadcast %3 : vector<1x160xf32> to vector<8x160xf32>
    %5 = arith.addf %2, %4 : vector<8x160xf32>
    %c0_5 = arith.constant 0 : index
    %c0_6 = arith.constant 0 : index
    %6 = vector.load %arg7[%c0_5, %c0_6] : memref<8x160xf32, #tpu.memory_space<vmem>>, vector<8x160xf32>
    tpu.vector_store %arg7[%c0_5, %c0_6], %5 {strides = array<i32>} : memref<8x160xf32, #tpu.memory_space<vmem>>, vector<8x160xf32>,
    %c0_7 = arith.constant 0 : index
    %c0_8 = arith.constant 0 : index
    %7 = vector.load %arg2[%c0_7, %c0_8] : memref<40x160xf32, #tpu.memory_space<vmem>>, vector<40x160xf32>
    %c0_9 = arith.constant 0 : index
    %c0_10 = arith.constant 0 : index
    %8 = vector.load %arg4[%c0_9, %c0_10] : memref<1x40xf32, #tpu.memory_space<vmem>>, vector<1x40xf32>
    %cst_11 = arith.constant 0.000000e+00 : f32
    %9 = vector.broadcast %cst_11 : f32 to vector<1x40xf32>
    %cst_12 = arith.constant 0.000000e+00 : f32
    %10 = vector.broadcast %cst_12 : f32 to vector<1x40xf32>
    %cst_13 = arith.constant 0xFF800000 : f32
    %11 = vector.broadcast %cst_13 : f32 to vector<1x40xf32>
    %c0_i32 = arith.constant 0 : i32
    %12 = arith.index_cast %c0_i32 : i32 to index
    %c0_14 = arith.constant 0 : index
    %13 = vector.load %arg7[%12, %c0_14] : memref<8x160xf32, #tpu.memory_space<vmem>>, vector<1x160xf32>
    %cst_15 = arith.constant dense<0.000000e+00> : vector<1x160xf32>
    %14 = tpu.matmul %9, %7, %cst_15 {dimension_numbers = #tpu.dot_dimension_numbers<[1], [0], [0], [1], [0, 0, 1, 1], [], []>} : vector<1x40xf32>, vector<40x160xf32>, vector<1x160xf32> -> vector<1x160xf32>
    %15 = arith.addf %13, %14 : vector<1x160xf32>
    %16 = vector.extract_strided_slice %15 {offsets = [0, 0], sizes = [1, 120], strides = [1, 1]} : vector<1x160xf32> to vector<1x120xf32>
    %17 = arith.negf %16 : vector<1x120xf32>
    %18 = math.exp %17 : vector<1x120xf32>
    %cst_16 = arith.constant 1.000000e+00 : f32
    %19 = vector.broadcast %cst_16 : f32 to vector<1x120xf32>
    %20 = arith.addf %19, %18 : vector<1x120xf32>
    %21 = arith.divf %19, %20 : vector<1x120xf32>
    %22 = vector.extract_strided_slice %15 {offsets = [0, 120], sizes = [1, 40], strides = [1, 1]} : vector<1x160xf32> to vector<1x40xf32>
    %23 = math.tanh %22 : vector<1x40xf32>
    %24 = vector.extract_strided_slice %21 {offsets = [0, 0], sizes = [1, 40], strides = [1, 1]} : vector<1x120xf32> to vector<1x40xf32>
    %25 = vector.extract_strided_slice %21 {offsets = [0, 40], sizes = [1, 40], strides = [1, 1]} : vector<1x120xf32> to vector<1x40xf32>
    %26 = vector.extract_strided_slice %21 {offsets = [0, 80], sizes = [1, 40], strides = [1, 1]} : vector<1x120xf32> to vector<1x40xf32>
    %27 = arith.mulf %25, %10 : vector<1x40xf32>
    %28 = arith.mulf %24, %23 : vector<1x40xf32>
    %29 = arith.addf %27, %28 : vector<1x40xf32>
    %30 = math.tanh %29 : vector<1x40xf32>
    %31 = arith.mulf %26, %30 : vector<1x40xf32>
    %32 = arith.maximumf %11, %31 : vector<1x40xf32>
    %c1_i32 = arith.constant 1 : i32
    %33 = arith.index_cast %c1_i32 : i32 to index
    %c0_17 = arith.constant 0 : index
    %34 = vector.load %arg7[%33, %c0_17] : memref<8x160xf32, #tpu.memory_space<vmem>>, vector<1x160xf32>
    %cst_18 = arith.constant dense<0.000000e+00> : vector<1x160xf32>
    %35 = tpu.matmul %31, %7, %cst_18 {dimension_numbers = #tpu.dot_dimension_numbers<[1], [0], [0], [1], [0, 0, 1, 1], [], []>} : vector<1x40xf32>, vector<40x160xf32>, vector<1x160xf32> -> vector<1x160xf32>
    %36 = arith.addf %34, %35 : vector<1x160xf32>
    %37 = vector.extract_strided_slice %36 {offsets = [0, 0], sizes = [1, 120], strides = [1, 1]} : vector<1x160xf32> to vector<1x120xf32>
    %38 = arith.negf %37 : vector<1x120xf32>
    %39 = math.exp %38 : vector<1x120xf32>
    %cst_19 = arith.constant 1.000000e+00 : f32
    %40 = vector.broadcast %cst_19 : f32 to vector<1x120xf32>
    %41 = arith.addf %40, %39 : vector<1x120xf32>
    %42 = arith.divf %40, %41 : vector<1x120xf32>
    %43 = vector.extract_strided_slice %36 {offsets = [0, 120], sizes = [1, 40], strides = [1, 1]} : vector<1x160xf32> to vector<1x40xf32>
    %44 = math.tanh %43 : vector<1x40xf32>
    %45 = vector.extract_strided_slice %42 {offsets = [0, 0], sizes = [1, 40], strides = [1, 1]} : vector<1x120xf32> to vector<1x40xf32>
    %46 = vector.extract_strided_slice %42 {offsets = [0, 40], sizes = [1, 40], strides = [1, 1]} : vector<1x120xf32> to vector<1x40xf32>
    %47 = vector.extract_strided_slice %42 {offsets = [0, 80], sizes = [1, 40], strides = [1, 1]} : vector<1x120xf32> to vector<1x40xf32>
    %48 = arith.mulf %46, %29 : vector<1x40xf32>
    %49 = arith.mulf %45, %44 : vector<1x40xf32>
    %50 = arith.addf %48, %49 : vector<1x40xf32>
    %51 = math.tanh %50 : vector<1x40xf32>
    %52 = arith.mulf %47, %51 : vector<1x40xf32>
    %53 = arith.maximumf %32, %52 : vector<1x40xf32>
    %c2_i32 = arith.constant 2 : i32
    %54 = arith.index_cast %c2_i32 : i32 to index
    %c0_20 = arith.constant 0 : index
    %55 = vector.load %arg7[%54, %c0_20] : memref<8x160xf32, #tpu.memory_space<vmem>>, vector<1x160xf32>
    %cst_21 = arith.constant dense<0.000000e+00> : vector<1x160xf32>
    %56 = tpu.matmul %52, %7, %cst_21 {dimension_numbers = #tpu.dot_dimension_numbers<[1], [0], [0], [1], [0, 0, 1, 1], [], []>} : vector<1x40xf32>, vector<40x160xf32>, vector<1x160xf32> -> vector<1x160xf32>
    %57 = arith.addf %55, %56 : vector<1x160xf32>
    %58 = vector.extract_strided_slice %57 {offsets = [0, 0], sizes = [1, 120], strides = [1, 1]} : vector<1x160xf32> to vector<1x120xf32>
    %59 = arith.negf %58 : vector<1x120xf32>
    %60 = math.exp %59 : vector<1x120xf32>
    %cst_22 = arith.constant 1.000000e+00 : f32
    %61 = vector.broadcast %cst_22 : f32 to vector<1x120xf32>
    %62 = arith.addf %61, %60 : vector<1x120xf32>
    %63 = arith.divf %61, %62 : vector<1x120xf32>
    %64 = vector.extract_strided_slice %57 {offsets = [0, 120], sizes = [1, 40], strides = [1, 1]} : vector<1x160xf32> to vector<1x40xf32>
    %65 = math.tanh %64 : vector<1x40xf32>
    %66 = vector.extract_strided_slice %63 {offsets = [0, 0], sizes = [1, 40], strides = [1, 1]} : vector<1x120xf32> to vector<1x40xf32>
    %67 = vector.extract_strided_slice %63 {offsets = [0, 40], sizes = [1, 40], strides = [1, 1]} : vector<1x120xf32> to vector<1x40xf32>
    %68 = vector.extract_strided_slice %63 {offsets = [0, 80], sizes = [1, 40], strides = [1, 1]} : vector<1x120xf32> to vector<1x40xf32>
    %69 = arith.mulf %67, %50 : vector<1x40xf32>
    %70 = arith.mulf %66, %65 : vector<1x40xf32>
    %71 = arith.addf %69, %70 : vector<1x40xf32>
    %72 = math.tanh %71 : vector<1x40xf32>
    %73 = arith.mulf %68, %72 : vector<1x40xf32>
    %74 = arith.maximumf %53, %73 : vector<1x40xf32>
    %c3_i32 = arith.constant 3 : i32
    %75 = arith.index_cast %c3_i32 : i32 to index
    %c0_23 = arith.constant 0 : index
    %76 = vector.load %arg7[%75, %c0_23] : memref<8x160xf32, #tpu.memory_space<vmem>>, vector<1x160xf32>
    %cst_24 = arith.constant dense<0.000000e+00> : vector<1x160xf32>
    %77 = tpu.matmul %73, %7, %cst_24 {dimension_numbers = #tpu.dot_dimension_numbers<[1], [0], [0], [1], [0, 0, 1, 1], [], []>} : vector<1x40xf32>, vector<40x160xf32>, vector<1x160xf32> -> vector<1x160xf32>
    %78 = arith.addf %76, %77 : vector<1x160xf32>
    %79 = vector.extract_strided_slice %78 {offsets = [0, 0], sizes = [1, 120], strides = [1, 1]} : vector<1x160xf32> to vector<1x120xf32>
    %80 = arith.negf %79 : vector<1x120xf32>
    %81 = math.exp %80 : vector<1x120xf32>
    %cst_25 = arith.constant 1.000000e+00 : f32
    %82 = vector.broadcast %cst_25 : f32 to vector<1x120xf32>
    %83 = arith.addf %82, %81 : vector<1x120xf32>
    %84 = arith.divf %82, %83 : vector<1x120xf32>
    %85 = vector.extract_strided_slice %78 {offsets = [0, 120], sizes = [1, 40], strides = [1, 1]} : vector<1x160xf32> to vector<1x40xf32>
    %86 = math.tanh %85 : vector<1x40xf32>
    %87 = vector.extract_strided_slice %84 {offsets = [0, 0], sizes = [1, 40], strides = [1, 1]} : vector<1x120xf32> to vector<1x40xf32>
    %88 = vector.extract_strided_slice %84 {offsets = [0, 40], sizes = [1, 40], strides = [1, 1]} : vector<1x120xf32> to vector<1x40xf32>
    %89 = vector.extract_strided_slice %84 {offsets = [0, 80], sizes = [1, 40], strides = [1, 1]} : vector<1x120xf32> to vector<1x40xf32>
    %90 = arith.mulf %88, %71 : vector<1x40xf32>
    %91 = arith.mulf %87, %86 : vector<1x40xf32>
    %92 = arith.addf %90, %91 : vector<1x40xf32>
    %93 = math.tanh %92 : vector<1x40xf32>
    %94 = arith.mulf %89, %93 : vector<1x40xf32>
    %95 = arith.maximumf %74, %94 : vector<1x40xf32>
    %c4_i32 = arith.constant 4 : i32
    %96 = arith.index_cast %c4_i32 : i32 to index
    %c0_26 = arith.constant 0 : index
    %97 = vector.load %arg7[%96, %c0_26] : memref<8x160xf32, #tpu.memory_space<vmem>>, vector<1x160xf32>
    %cst_27 = arith.constant dense<0.000000e+00> : vector<1x160xf32>
    %98 = tpu.matmul %94, %7, %cst_27 {dimension_numbers = #tpu.dot_dimension_numbers<[1], [0], [0], [1], [0, 0, 1, 1], [], []>} : vector<1x40xf32>, vector<40x160xf32>, vector<1x160xf32> -> vector<1x160xf32>
    %99 = arith.addf %97, %98 : vector<1x160xf32>
    %100 = vector.extract_strided_slice %99 {offsets = [0, 0], sizes = [1, 120], strides = [1, 1]} : vector<1x160xf32> to vector<1x120xf32>
    %101 = arith.negf %100 : vector<1x120xf32>
    %102 = math.exp %101 : vector<1x120xf32>
    %cst_28 = arith.constant 1.000000e+00 : f32
    %103 = vector.broadcast %cst_28 : f32 to vector<1x120xf32>
    %104 = arith.addf %103, %102 : vector<1x120xf32>
    %105 = arith.divf %103, %104 : vector<1x120xf32>
    %106 = vector.extract_strided_slice %99 {offsets = [0, 120], sizes = [1, 40], strides = [1, 1]} : vector<1x160xf32> to vector<1x40xf32>
    %107 = math.tanh %106 : vector<1x40xf32>
    %108 = vector.extract_strided_slice %105 {offsets = [0, 0], sizes = [1, 40], strides = [1, 1]} : vector<1x120xf32> to vector<1x40xf32>
    %109 = vector.extract_strided_slice %105 {offsets = [0, 40], sizes = [1, 40], strides = [1, 1]} : vector<1x120xf32> to vector<1x40xf32>
    %110 = vector.extract_strided_slice %105 {offsets = [0, 80], sizes = [1, 40], strides = [1, 1]} : vector<1x120xf32> to vector<1x40xf32>
    %111 = arith.mulf %109, %92 : vector<1x40xf32>
    %112 = arith.mulf %108, %107 : vector<1x40xf32>
    %113 = arith.addf %111, %112 : vector<1x40xf32>
    %114 = math.tanh %113 : vector<1x40xf32>
    %115 = arith.mulf %110, %114 : vector<1x40xf32>
    %116 = arith.maximumf %95, %115 : vector<1x40xf32>
    %c5_i32 = arith.constant 5 : i32
    %117 = arith.index_cast %c5_i32 : i32 to index
    %c0_29 = arith.constant 0 : index
    %118 = vector.load %arg7[%117, %c0_29] : memref<8x160xf32, #tpu.memory_space<vmem>>, vector<1x160xf32>
    %cst_30 = arith.constant dense<0.000000e+00> : vector<1x160xf32>
    %119 = tpu.matmul %115, %7, %cst_30 {dimension_numbers = #tpu.dot_dimension_numbers<[1], [0], [0], [1], [0, 0, 1, 1], [], []>} : vector<1x40xf32>, vector<40x160xf32>, vector<1x160xf32> -> vector<1x160xf32>
    %120 = arith.addf %118, %119 : vector<1x160xf32>
    %121 = vector.extract_strided_slice %120 {offsets = [0, 0], sizes = [1, 120], strides = [1, 1]} : vector<1x160xf32> to vector<1x120xf32>
    %122 = arith.negf %121 : vector<1x120xf32>
    %123 = math.exp %122 : vector<1x120xf32>
    %cst_31 = arith.constant 1.000000e+00 : f32
    %124 = vector.broadcast %cst_31 : f32 to vector<1x120xf32>
    %125 = arith.addf %124, %123 : vector<1x120xf32>
    %126 = arith.divf %124, %125 : vector<1x120xf32>
    %127 = vector.extract_strided_slice %120 {offsets = [0, 120], sizes = [1, 40], strides = [1, 1]} : vector<1x160xf32> to vector<1x40xf32>
    %128 = math.tanh %127 : vector<1x40xf32>
    %129 = vector.extract_strided_slice %126 {offsets = [0, 0], sizes = [1, 40], strides = [1, 1]} : vector<1x120xf32> to vector<1x40xf32>
    %130 = vector.extract_strided_slice %126 {offsets = [0, 40], sizes = [1, 40], strides = [1, 1]} : vector<1x120xf32> to vector<1x40xf32>
    %131 = vector.extract_strided_slice %126 {offsets = [0, 80], sizes = [1, 40], strides = [1, 1]} : vector<1x120xf32> to vector<1x40xf32>
    %132 = arith.mulf %130, %113 : vector<1x40xf32>
    %133 = arith.mulf %129, %128 : vector<1x40xf32>
    %134 = arith.addf %132, %133 : vector<1x40xf32>
    %135 = math.tanh %134 : vector<1x40xf32>
    %136 = arith.mulf %131, %135 : vector<1x40xf32>
    %137 = arith.maximumf %116, %136 : vector<1x40xf32>
    %c6_i32 = arith.constant 6 : i32
    %138 = arith.index_cast %c6_i32 : i32 to index
    %c0_32 = arith.constant 0 : index
    %139 = vector.load %arg7[%138, %c0_32] : memref<8x160xf32, #tpu.memory_space<vmem>>, vector<1x160xf32>
    %cst_33 = arith.constant dense<0.000000e+00> : vector<1x160xf32>
    %140 = tpu.matmul %136, %7, %cst_33 {dimension_numbers = #tpu.dot_dimension_numbers<[1], [0], [0], [1], [0, 0, 1, 1], [], []>} : vector<1x40xf32>, vector<40x160xf32>, vector<1x160xf32> -> vector<1x160xf32>
    %141 = arith.addf %139, %140 : vector<1x160xf32>
    %142 = vector.extract_strided_slice %141 {offsets = [0, 0], sizes = [1, 120], strides = [1, 1]} : vector<1x160xf32> to vector<1x120xf32>
    %143 = arith.negf %142 : vector<1x120xf32>
    %144 = math.exp %143 : vector<1x120xf32>
    %cst_34 = arith.constant 1.000000e+00 : f32
    %145 = vector.broadcast %cst_34 : f32 to vector<1x120xf32>
    %146 = arith.addf %145, %144 : vector<1x120xf32>
    %147 = arith.divf %145, %146 : vector<1x120xf32>
    %148 = vector.extract_strided_slice %141 {offsets = [0, 120], sizes = [1, 40], strides = [1, 1]} : vector<1x160xf32> to vector<1x40xf32>
    %149 = math.tanh %148 : vector<1x40xf32>
    %150 = vector.extract_strided_slice %147 {offsets = [0, 0], sizes = [1, 40], strides = [1, 1]} : vector<1x120xf32> to vector<1x40xf32>
    %151 = vector.extract_strided_slice %147 {offsets = [0, 40], sizes = [1, 40], strides = [1, 1]} : vector<1x120xf32> to vector<1x40xf32>
    %152 = vector.extract_strided_slice %147 {offsets = [0, 80], sizes = [1, 40], strides = [1, 1]} : vector<1x120xf32> to vector<1x40xf32>
    %153 = arith.mulf %151, %134 : vector<1x40xf32>
    %154 = arith.mulf %150, %149 : vector<1x40xf32>
    %155 = arith.addf %153, %154 : vector<1x40xf32>
    %156 = math.tanh %155 : vector<1x40xf32>
    %157 = arith.mulf %152, %156 : vector<1x40xf32>
    %158 = arith.maximumf %137, %157 : vector<1x40xf32>
    %c7_i32 = arith.constant 7 : i32
    %159 = arith.index_cast %c7_i32 : i32 to index
    %c0_35 = arith.constant 0 : index
    %160 = vector.load %arg7[%159, %c0_35] : memref<8x160xf32, #tpu.memory_space<vmem>>, vector<1x160xf32>
    %cst_36 = arith.constant dense<0.000000e+00> : vector<1x160xf32>
    %161 = tpu.matmul %157, %7, %cst_36 {dimension_numbers = #tpu.dot_dimension_numbers<[1], [0], [0], [1], [0, 0, 1, 1], [], []>} : vector<1x40xf32>, vector<40x160xf32>, vector<1x160xf32> -> vector<1x160xf32>
    %162 = arith.addf %160, %161 : vector<1x160xf32>
    %163 = vector.extract_strided_slice %162 {offsets = [0, 0], sizes = [1, 120], strides = [1, 1]} : vector<1x160xf32> to vector<1x120xf32>
    %164 = arith.negf %163 : vector<1x120xf32>
    %165 = math.exp %164 : vector<1x120xf32>
    %cst_37 = arith.constant 1.000000e+00 : f32
    %166 = vector.broadcast %cst_37 : f32 to vector<1x120xf32>
    %167 = arith.addf %166, %165 : vector<1x120xf32>
    %168 = arith.divf %166, %167 : vector<1x120xf32>
    %169 = vector.extract_strided_slice %162 {offsets = [0, 120], sizes = [1, 40], strides = [1, 1]} : vector<1x160xf32> to vector<1x40xf32>
    %170 = math.tanh %169 : vector<1x40xf32>
    %171 = vector.extract_strided_slice %168 {offsets = [0, 0], sizes = [1, 40], strides = [1, 1]} : vector<1x120xf32> to vector<1x40xf32>
    %172 = vector.extract_strided_slice %168 {offsets = [0, 40], sizes = [1, 40], strides = [1, 1]} : vector<1x120xf32> to vector<1x40xf32>
    %173 = vector.extract_strided_slice %168 {offsets = [0, 80], sizes = [1, 40], strides = [1, 1]} : vector<1x120xf32> to vector<1x40xf32>
    %174 = arith.mulf %172, %155 : vector<1x40xf32>
    %175 = arith.mulf %171, %170 : vector<1x40xf32>
    %176 = arith.addf %174, %175 : vector<1x40xf32>
    %177 = math.tanh %176 : vector<1x40xf32>
    %178 = arith.mulf %173, %177 : vector<1x40xf32>
    %179 = arith.maximumf %158, %178 : vector<1x40xf32>
    %c8_i32 = arith.constant 8 : i32
    %180 = arith.mulf %179, %8 : vector<1x40xf32>
    %cst_38 = arith.constant dense<0.000000e+00> : vector<1xf32>
    %181 = vector.multi_reduction <add>, %180, %cst_38 [1] : vector<1x40xf32> to vector<1xf32>
    %182 = vector.shape_cast %181 : vector<1xf32> to vector<1x1xf32>
    %c0_39 = arith.constant 0 : index
    %c0_40 = arith.constant 0 : index
    %183 = vector.load %arg5[%c0_39, %c0_40] : memref<1x1xf32, #tpu.memory_space<vmem>>, vector<1x1xf32>
    %184 = arith.addf %182, %183 : vector<1x1xf32>
    %185 = arith.negf %184 : vector<1x1xf32>
    %186 = math.exp %185 : vector<1x1xf32>
    %cst_41 = arith.constant 1.000000e+00 : f32
    %187 = vector.broadcast %cst_41 : f32 to vector<1x1xf32>
    %188 = arith.addf %187, %186 : vector<1x1xf32>
    %189 = arith.divf %187, %188 : vector<1x1xf32>
    %c0_42 = arith.constant 0 : index
    %c0_43 = arith.constant 0 : index
    %190 = vector.load %arg6[%c0_42, %c0_43] : memref<1x1xf32, #tpu.memory_space<vmem>>, vector<1x1xf32>
    tpu.vector_store %arg6[%c0_42, %c0_43], %189 {strides = array<i32>} : memref<1x1xf32, #tpu.memory_space<vmem>>, vector<1x1xf32>,
    return
  }
}

</mosaic_0001>

<llo_original>
// kernel: tpu_custom_call.1
$region0: #{tpu_custom_call.1}
  #allocation0 [shape = 'u32[]', space=smem, size = 0x4, offset = 0x4, fixed_abs, tag = 'smem constant byte address 0x4 - core index']
  #allocation1 [shape = 'u32[144,128]{1,0:T(1,128)}', space=vmem, size = 0x12000, scoped, tag = 'internal scratch']
  #allocation2 [shape = 'f32[8,160]{1,0:T(8,128)}', space=vmem, size = 0x2000, scoped, tag = 'scratch operand']
  #allocation3 [shape = 'f32[1,1]{1,0:T(1,128)S(1)}', space=vmem, size = 0x200, scoped, tag = 'scoped memory for tpu_custom_call.1']
  %s0 = inlined_call_operand.vmem [shape: f32[8,768], index: 0, kind: input, shape index: {}]
  %s1 = inlined_call_operand.vmem [shape: f32[768,160], index: 1, kind: input, shape index: {}]
  %s2 = inlined_call_operand.vmem [shape: f32[40,160], index: 2, kind: input, shape index: {}]
  %s3 = inlined_call_operand.vmem [shape: f32[1,160], index: 3, kind: input, shape index: {}]
  %s4 = inlined_call_operand.vmem [shape: f32[1,40], index: 4, kind: input, shape index: {}]
  %s5 = inlined_call_operand.<no memory space> [shape: f32[1,1], index: 5, kind: input, shape index: {}]
  %s6 = inlined_call_operand.hbm [shape: f32[1,1], index: 6, kind: output, shape index: {}]
  %s7 = sld [smem:[#allocation0]]
  $region34: #{tpu_custom_call.1} parent=0
    _
  %s9 = ssub.s32 1, %s7
  %s10 = scalar_select 0, %s9, %s7
  %v11 = vstv %s5
  %12 = vst [vmem:[#allocation3] sm:$0x1] %v11
  $region1: #{tpu_custom_call.1} parent=0
    #allocation4 [shape = 'u8[512]{0}', space=vmem, size = 0x400, scoped, tag = 'output window, operand 0, single buffered']
    #allocation5 [shape = 's32[1]{0}', space=sflag, size = 0x4, scoped, tag = 'scoped memory for tpu_custom_call.1']
    %13 = vsyncpa [#allocation5], 0
    // Predicated region
    $region2: #{tpu_custom_call.1} parent=1 // pred_check
      _
    $region3: #{tpu_custom_call.1} parent=1 // pred_check_branch
      %15 = sbr.rel (0) target = $region5
    $region4: #{tpu_custom_call.1} parent=1 // pred_region
      _
    $region5: #{tpu_custom_call.1} parent=1 // pred_fallthru
      _
    // Predicated region
    $region6: #{tpu_custom_call.1} parent=1 // pred_check
      _
    $region7: #{tpu_custom_call.1} parent=1 // pred_check_branch
      %17 = sbr.rel (0) target = $region9
    $region8: #{tpu_custom_call.1} parent=1 // pred_region
      _
    $region9: #{tpu_custom_call.1} parent=1 // pred_fallthru
      _
    // Predicated region
    $region10: #{tpu_custom_call.1} parent=1 // pred_check
      _
    $region11: #{tpu_custom_call.1} parent=1 // pred_check_branch
      %19 = sbr.rel (0) target = $region13
    $region12: #{tpu_custom_call.1} parent=1 // pred_region
      _
    $region13: #{tpu_custom_call.1} parent=1 // pred_fallthru
      _
    // Predicated region
    $region14: #{tpu_custom_call.1} parent=1 // pred_check
      _
    $region15: #{tpu_custom_call.1} parent=1 // pred_check_branch
      %21 = sbr.rel (0) target = $region17
    $region16: #{tpu_custom_call.1} parent=1 // pred_region
      _
    $region17: #{tpu_custom_call.1} parent=1 // pred_fallthru
      _
    // Predicated region
    $region18: #{tpu_custom_call.1} parent=1 // pred_check
      _
    $region19: #{tpu_custom_call.1} parent=1 // pred_check_branch
      %23 = sbr.rel (0) target = $region21
    $region20: #{tpu_custom_call.1} parent=1 // pred_region
      _
    $region21: #{tpu_custom_call.1} parent=1 // pred_fallthru
      _
    // Predicated region
    $region22: #{tpu_custom_call.1} parent=1 // pred_check
      _
    $region23: #{tpu_custom_call.1} parent=1 // pred_check_branch
      %25 = sbr.rel (0) target = $region25
    $region24: #{tpu_custom_call.1} parent=1 // pred_region
      _
    $region25: #{tpu_custom_call.1} parent=1 // pred_fallthru
      _
    %v26 = vld [vmem:[%s0] sm:$0xff]
    %v27 = vld [vmem:[%s0 + $0x8] sm:$0xff]
    %v28 = vld [vmem:[%s0 + $0x10] sm:$0xff]
    %v29 = vld [vmem:[%s0 + $0x18] sm:$0xff]
    %v30 = vld [vmem:[%s0 + $0x20] sm:$0xff]
    %v31 = vld [vmem:[%s0 + $0x28] sm:$0xff]
    %v32 = vld [vmem:[%s1] sm:$0xff]
    %v33 = vld [vmem:[%s1 + $0x8] sm:$0xff]
    %v34 = vld [vmem:[%s1 + $0x10] sm:$0xff]
    %v35 = vld [vmem:[%s1 + $0x18] sm:$0xff]
    %v36 = vld [vmem:[%s1 + $0x20] sm:$0xff]
    %v37 = vld [vmem:[%s1 + $0x28] sm:$0xff]
    %v38 = vld [vmem:[%s1 + $0x30] sm:$0xff]
    %v39 = vld [vmem:[%s1 + $0x38] sm:$0xff]
    %v40 = vld [vmem:[%s1 + $0x40] sm:$0xff]
    %v41 = vld [vmem:[%s1 + $0x48] sm:$0xff]
    %v42 = vld [vmem:[%s1 + $0x50] sm:$0xff]
    %v43 = vld [vmem:[%s1 + $0x58] sm:$0xff]
    %v44 = vld [vmem:[%s1 + $0x60] sm:$0xff]
    %v45 = vld [vmem:[%s1 + $0x68] sm:$0xff]
    %v46 = vld [vmem:[%s1 + $0x70] sm:$0xff]
    %v47 = vld [vmem:[%s1 + $0x78] sm:$0xff]
    %v48 = vld [vmem:[%s1 + $0x80] sm:$0xff]
    %v49 = vld [vmem:[%s1 + $0x88] sm:$0xff]
    %v50 = vld [vmem:[%s1 + $0x90] sm:$0xff]
    %v51 = vld [vmem:[%s1 + $0x98] sm:$0xff]
    %v52 = vld [vmem:[%s1 + $0xa0] sm:$0xff]
    %v53 = vld [vmem:[%s1 + $0xa8] sm:$0xff]
    %v54 = vld [vmem:[%s1 + $0xb0] sm:$0xff]
    %v55 = vld [vmem:[%s1 + $0xb8] sm:$0xff]
    %v56 = vld [vmem:[%s1 + $0xc0] sm:$0xff]
    %v57 = vld [vmem:[%s1 + $0xc8] sm:$0xff]
    %v58 = vld [vmem:[%s1 + $0xd0] sm:$0xff]
    %v59 = vld [vmem:[%s1 + $0xd8] sm:$0xff]
    %v60 = vld [vmem:[%s1 + $0xe0] sm:$0xff]
    %v61 = vld [vmem:[%s1 + $0xe8] sm:$0xff]
    %v62 = vld [vmem:[%s1 + $0xf0] sm:$0xff]
    %v63 = vld [vmem:[%s1 + $0xf8] sm:$0xff]
    %v64 = vld [vmem:[%s1 + $0x100] sm:$0xff]
    %v65 = vld [vmem:[%s1 + $0x108] sm:$0xff]
    %v66 = vld [vmem:[%s1 + $0x110] sm:$0xff]
    %v67 = vld [vmem:[%s1 + $0x118] sm:$0xff]
    %v68 = vld [vmem:[%s1 + $0x120] sm:$0xff]
    %v69 = vld [vmem:[%s1 + $0x128] sm:$0xff]
    %v70 = vld [vmem:[%s1 + $0x130] sm:$0xff]
    %v71 = vld [vmem:[%s1 + $0x138] sm:$0xff]
    %v72 = vld [vmem:[%s1 + $0x140] sm:$0xff]
    %v73 = vld [vmem:[%s1 + $0x148] sm:$0xff]
    %v74 = vld [vmem:[%s1 + $0x150] sm:$0xff]
    %v75 = vld [vmem:[%s1 + $0x158] sm:$0xff]
    %v76 = vld [vmem:[%s1 + $0x160] sm:$0xff]
    %v77 = vld [vmem:[%s1 + $0x168] sm:$0xff]
    %v78 = vld [vmem:[%s1 + $0x170] sm:$0xff]
    %v79 = vld [vmem:[%s1 + $0x178] sm:$0xff]
    %v80 = vld [vmem:[%s1 + $0x180] sm:$0xff]
    %v81 = vld [vmem:[%s1 + $0x188] sm:$0xff]
    %v82 = vld [vmem:[%s1 + $0x190] sm:$0xff]
    %v83 = vld [vmem:[%s1 + $0x198] sm:$0xff]
    %v84 = vld [vmem:[%s1 + $0x1a0] sm:$0xff]
    %v85 = vld [vmem:[%s1 + $0x1a8] sm:$0xff]
    %v86 = vld [vmem:[%s1 + $0x1b0] sm:$0xff]
    %v87 = vld [vmem:[%s1 + $0x1b8] sm:$0xff]
    %v88 = vld [vmem:[%s1 + $0x1c0] sm:$0xff]
    %v89 = vld [vmem:[%s1 + $0x1c8] sm:$0xff]
    %v90 = vld [vmem:[%s1 + $0x1d0] sm:$0xff]
    %v91 = vld [vmem:[%s1 + $0x1d8] sm:$0xff]
    %v92 = vld [vmem:[%s1 + $0x1e0] sm:$0xff]
    %v93 = vld [vmem:[%s1 + $0x1e8] sm:$0xff]
    %v94 = vld [vmem:[%s1 + $0x1f0] sm:$0xff]
    %v95 = vld [vmem:[%s1 + $0x1f8] sm:$0xff]
    %v96 = vld [vmem:[%s1 + $0x200] sm:$0xff]
    %v97 = vld [vmem:[%s1 + $0x208] sm:$0xff]
    %v98 = vld [vmem:[%s1 + $0x210] sm:$0xff]
    %v99 = vld [vmem:[%s1 + $0x218] sm:$0xff]
    %v100 = vld [vmem:[%s1 + $0x220] sm:$0xff]
    %v101 = vld [vmem:[%s1 + $0x228] sm:$0xff]
    %v102 = vld [vmem:[%s1 + $0x230] sm:$0xff]
    %v103 = vld [vmem:[%s1 + $0x238] sm:$0xff]
    %v104 = vld [vmem:[%s1 + $0x240] sm:$0xff]
    %v105 = vld [vmem:[%s1 + $0x248] sm:$0xff]
    %v106 = vld [vmem:[%s1 + $0x250] sm:$0xff]
    %v107 = vld [vmem:[%s1 + $0x258] sm:$0xff]
    %v108 = vld [vmem:[%s1 + $0x260] sm:$0xff]
    %v109 = vld [vmem:[%s1 + $0x268] sm:$0xff]
    %v110 = vld [vmem:[%s1 + $0x270] sm:$0xff]
    %v111 = vld [vmem:[%s1 + $0x278] sm:$0xff]
    %v112 = vld [vmem:[%s1 + $0x280] sm:$0xff]
    %v113 = vld [vmem:[%s1 + $0x288] sm:$0xff]
    %v114 = vld [vmem:[%s1 + $0x290] sm:$0xff]
    %v115 = vld [vmem:[%s1 + $0x298] sm:$0xff]
    %v116 = vld [vmem:[%s1 + $0x2a0] sm:$0xff]
    %v117 = vld [vmem:[%s1 + $0x2a8] sm:$0xff]
    %v118 = vld [vmem:[%s1 + $0x2b0] sm:$0xff]
    %v119 = vld [vmem:[%s1 + $0x2b8] sm:$0xff]
    %v120 = vld [vmem:[%s1 + $0x2c0] sm:$0xff]
    %v121 = vld [vmem:[%s1 + $0x2c8] sm:$0xff]
    %v122 = vld [vmem:[%s1 + $0x2d0] sm:$0xff]
    %v123 = vld [vmem:[%s1 + $0x2d8] sm:$0xff]
    %v124 = vld [vmem:[%s1 + $0x2e0] sm:$0xff]
    %v125 = vld [vmem:[%s1 + $0x2e8] sm:$0xff]
    %v126 = vld [vmem:[%s1 + $0x2f0] sm:$0xff]
    %v127 = vld [vmem:[%s1 + $0x2f8] sm:$0xff]
    %v128 = vld [vmem:[%s1 + $0x300] sm:$0xff]
    %v129 = vld [vmem:[%s1 + $0x308] sm:$0xff]
    %v130 = vld [vmem:[%s1 + $0x310] sm:$0xff]
    %v131 = vld [vmem:[%s1 + $0x318] sm:$0xff]
    %v132 = vld [vmem:[%s1 + $0x320] sm:$0xff]
    %v133 = vld [vmem:[%s1 + $0x328] sm:$0xff]
    %v134 = vld [vmem:[%s1 + $0x330] sm:$0xff]
    %v135 = vld [vmem:[%s1 + $0x338] sm:$0xff]
    %v136 = vld [vmem:[%s1 + $0x340] sm:$0xff]
    %v137 = vld [vmem:[%s1 + $0x348] sm:$0xff]
    %v138 = vld [vmem:[%s1 + $0x350] sm:$0xff]
    %v139 = vld [vmem:[%s1 + $0x358] sm:$0xff]
    %v140 = vld [vmem:[%s1 + $0x360] sm:$0xff]
    %v141 = vld [vmem:[%s1 + $0x368] sm:$0xff]
    %v142 = vld [vmem:[%s1 + $0x370] sm:$0xff]
    %v143 = vld [vmem:[%s1 + $0x378] sm:$0xff]
    %v144 = vld [vmem:[%s1 + $0x380] sm:$0xff]
    %v145 = vld [vmem:[%s1 + $0x388] sm:$0xff]
    %v146 = vld [vmem:[%s1 + $0x390] sm:$0xff]
    %v147 = vld [vmem:[%s1 + $0x398] sm:$0xff]
    %v148 = vld [vmem:[%s1 + $0x3a0] sm:$0xff]
    %v149 = vld [vmem:[%s1 + $0x3a8] sm:$0xff]
    %v150 = vld [vmem:[%s1 + $0x3b0] sm:$0xff]
    %v151 = vld [vmem:[%s1 + $0x3b8] sm:$0xff]
    %v152 = vld [vmem:[%s1 + $0x3c0] sm:$0xff]
    %v153 = vld [vmem:[%s1 + $0x3c8] sm:$0xff]
    %v154 = vld [vmem:[%s1 + $0x3d0] sm:$0xff]
    %v155 = vld [vmem:[%s1 + $0x3d8] sm:$0xff]
    %v156 = vld [vmem:[%s1 + $0x3e0] sm:$0xff]
    %v157 = vld [vmem:[%s1 + $0x3e8] sm:$0xff]
    %v158 = vld [vmem:[%s1 + $0x3f0] sm:$0xff]
    %v159 = vld [vmem:[%s1 + $0x3f8] sm:$0xff]
    %v160 = vld [vmem:[%s1 + $0x400] sm:$0xff]
    %v161 = vld [vmem:[%s1 + $0x408] sm:$0xff]
    %v162 = vld [vmem:[%s1 + $0x410] sm:$0xff]
    %v163 = vld [vmem:[%s1 + $0x418] sm:$0xff]
    %v164 = vld [vmem:[%s1 + $0x420] sm:$0xff]
    %v165 = vld [vmem:[%s1 + $0x428] sm:$0xff]
    %v166 = vld [vmem:[%s1 + $0x430] sm:$0xff]
    %v167 = vld [vmem:[%s1 + $0x438] sm:$0xff]
    %v168 = vld [vmem:[%s1 + $0x440] sm:$0xff]
    %v169 = vld [vmem:[%s1 + $0x448] sm:$0xff]
    %v170 = vld [vmem:[%s1 + $0x450] sm:$0xff]
    %v171 = vld [vmem:[%s1 + $0x458] sm:$0xff]
    %v172 = vld [vmem:[%s1 + $0x460] sm:$0xff]
    %v173 = vld [vmem:[%s1 + $0x468] sm:$0xff]
    %v174 = vld [vmem:[%s1 + $0x470] sm:$0xff]
    %v175 = vld [vmem:[%s1 + $0x478] sm:$0xff]
    %v176 = vld [vmem:[%s1 + $0x480] sm:$0xff]
    %v177 = vld [vmem:[%s1 + $0x488] sm:$0xff]
    %v178 = vld [vmem:[%s1 + $0x490] sm:$0xff]
    %v179 = vld [vmem:[%s1 + $0x498] sm:$0xff]
    %v180 = vld [vmem:[%s1 + $0x4a0] sm:$0xff]
    %v181 = vld [vmem:[%s1 + $0x4a8] sm:$0xff]
    %v182 = vld [vmem:[%s1 + $0x4b0] sm:$0xff]
    %v183 = vld [vmem:[%s1 + $0x4b8] sm:$0xff]
    %v184 = vld [vmem:[%s1 + $0x4c0] sm:$0xff]
    %v185 = vld [vmem:[%s1 + $0x4c8] sm:$0xff]
    %v186 = vld [vmem:[%s1 + $0x4d0] sm:$0xff]
    %v187 = vld [vmem:[%s1 + $0x4d8] sm:$0xff]
    %v188 = vld [vmem:[%s1 + $0x4e0] sm:$0xff]
    %v189 = vld [vmem:[%s1 + $0x4e8] sm:$0xff]
    %v190 = vld [vmem:[%s1 + $0x4f0] sm:$0xff]
    %v191 = vld [vmem:[%s1 + $0x4f8] sm:$0xff]
    %v192 = vld [vmem:[%s1 + $0x500] sm:$0xff]
    %v193 = vld [vmem:[%s1 + $0x508] sm:$0xff]
    %v194 = vld [vmem:[%s1 + $0x510] sm:$0xff]
    %v195 = vld [vmem:[%s1 + $0x518] sm:$0xff]
    %v196 = vld [vmem:[%s1 + $0x520] sm:$0xff]
    %v197 = vld [vmem:[%s1 + $0x528] sm:$0xff]
    %v198 = vld [vmem:[%s1 + $0x530] sm:$0xff]
    %v199 = vld [vmem:[%s1 + $0x538] sm:$0xff]
    %v200 = vld [vmem:[%s1 + $0x540] sm:$0xff]
    %v201 = vld [vmem:[%s1 + $0x548] sm:$0xff]
    %v202 = vld [vmem:[%s1 + $0x550] sm:$0xff]
    %v203 = vld [vmem:[%s1 + $0x558] sm:$0xff]
    %v204 = vld [vmem:[%s1 + $0x560] sm:$0xff]
    %v205 = vld [vmem:[%s1 + $0x568] sm:$0xff]
    %v206 = vld [vmem:[%s1 + $0x570] sm:$0xff]
    %v207 = vld [vmem:[%s1 + $0x578] sm:$0xff]
    %v208 = vld [vmem:[%s1 + $0x580] sm:$0xff]
    %v209 = vld [vmem:[%s1 + $0x588] sm:$0xff]
    %v210 = vld [vmem:[%s1 + $0x590] sm:$0xff]
    %v211 = vld [vmem:[%s1 + $0x598] sm:$0xff]
    %v212 = vld [vmem:[%s1 + $0x5a0] sm:$0xff]
    %v213 = vld [vmem:[%s1 + $0x5a8] sm:$0xff]
    %v214 = vld [vmem:[%s1 + $0x5b0] sm:$0xff]
    %v215 = vld [vmem:[%s1 + $0x5b8] sm:$0xff]
    %v216 = vld [vmem:[%s1 + $0x5c0] sm:$0xff]
    %v217 = vld [vmem:[%s1 + $0x5c8] sm:$0xff]
    %v218 = vld [vmem:[%s1 + $0x5d0] sm:$0xff]
    %v219 = vld [vmem:[%s1 + $0x5d8] sm:$0xff]
    %v220 = vld [vmem:[%s1 + $0x5e0] sm:$0xff]
    %v221 = vld [vmem:[%s1 + $0x5e8] sm:$0xff]
    %v222 = vld [vmem:[%s1 + $0x5f0] sm:$0xff]
    %v223 = vld [vmem:[%s1 + $0x5f8] sm:$0xff]
    %v224 = vld [vmem:[%s3] sm:$0x3]
    %v226 = vlaneseq
    %v227 = vshrl.u32 %v226, 7
    %v228 = vsub.s32 0, %v227
    %v229 = vrot.slane %v224, %v228
    %v230 = vlaneseq
    %v231 = vshrl.u32 %v230, 7
    %v232 = vsub.s32 1, %v231
    %v233 = vrot.slane %v224, %v232
    %236 = vmatprep.subr.mxu0 %v63
    %237 = vmatpush1.msra.mxu0 %v62
    %238 = vmatprep.subr.mxu0 %v61
    %239 = vmatpush1.msra.mxu0 %v60
    %240 = vmatprep.subr.mxu0 %v59
    %241 = vmatpush1.msra.mxu0 %v58
    %242 = vmatprep.subr.mxu0 %v57
    %243 = vmatpush1.msra.mxu0 %v56
    %244 = vmatprep.subr.mxu0 %v55
    %245 = vmatpush1.msra.mxu0 %v54
    %246 = vmatprep.subr.mxu0 %v53
    %247 = vmatpush1.msra.mxu0 %v52
    %248 = vmatprep.subr.mxu0 %v51
    %249 = vmatpush1.msra.mxu0 %v50
    %250 = vmatprep.subr.mxu0 %v49
    %251 = vmatpush1.msra.mxu0 %v48
    %252 = vmatprep.subr.mxu0 %v47
    %253 = vmatpush1.msra.mxu0 %v46
    %254 = vmatprep.subr.mxu0 %v45
    %255 = vmatpush1.msra.mxu0 %v44
    %256 = vmatprep.subr.mxu0 %v43
    %257 = vmatpush1.msra.mxu0 %v42
    %258 = vmatprep.subr.mxu0 %v41
    %259 = vmatpush1.msra.mxu0 %v40
    %260 = vmatprep.subr.mxu0 %v39
    %261 = vmatpush1.msra.mxu0 %v38
    %262 = vmatprep.subr.mxu0 %v37
    %263 = vmatpush1.msra.mxu0 %v36
    %264 = vmatprep.subr.mxu0 %v35
    %265 = vmatpush1.msra.mxu0 %v34
    %266 = vmatprep.subr.mxu0 %v33
    %267 = vmatpush1.msra.mxu0 %v32
    %268 = vmatprep.subr.mxu0 %v95
    %269 = vmatpush2.msra.mxu0 %v94
    %270 = vmatprep.subr.mxu0 %v93
    %271 = vmatpush2.msra.mxu0 %v92
    %272 = vmatprep.subr.mxu0 %v91
    %273 = vmatpush2.msra.mxu0 %v90
    %274 = vmatprep.subr.mxu0 %v89
    %275 = vmatpush2.msra.mxu0 %v88
    %276 = vmatprep.subr.mxu0 %v87
    %277 = vmatpush2.msra.mxu0 %v86
    %278 = vmatprep.subr.mxu0 %v85
    %279 = vmatpush2.msra.mxu0 %v84
    %280 = vmatprep.subr.mxu0 %v83
    %281 = vmatpush2.msra.mxu0 %v82
    %282 = vmatprep.subr.mxu0 %v81
    %283 = vmatpush2.msra.mxu0 %v80
    %284 = vmatprep.subr.mxu0 %v79
    %285 = vmatpush2.msra.mxu0 %v78
    %286 = vmatprep.subr.mxu0 %v77
    %287 = vmatpush2.msra.mxu0 %v76
    %288 = vmatprep.subr.mxu0 %v75
    %289 = vmatpush2.msra.mxu0 %v74
    %290 = vmatprep.subr.mxu0 %v73
    %291 = vmatpush2.msra.mxu0 %v72
    %292 = vmatprep.subr.mxu0 %v71
    %293 = vmatpush2.msra.mxu0 %v70
    %294 = vmatprep.subr.mxu0 %v69
    %295 = vmatpush2.msra.mxu0 %v68
    %296 = vmatprep.subr.mxu0 %v67
    %297 = vmatpush2.msra.mxu0 %v66
    %298 = vmatprep.subr.mxu0 %v65
    %299 = vmatpush2.msra.mxu0 %v64
    %300 = vmatprep.mubr.f32.mxu0 %v27
    %301 = vmatmul.mubr.f32.gmra.mxu0 %v26
    %v302 = vpop.f32.mrf.mxu0
    %v303 = vadd.f32 %v229, %v302
    %v304 = vpop.f32.mrf.mxu0
    %v305 = vadd.f32 %v233, %v304
    %306 = vdwg.mxu0
    %307 = vmatprep.subr.mxu0 %v127
    %308 = vmatpush1.msra.mxu0 %v126
    %309 = vmatprep.subr.mxu0 %v125
    %310 = vmatpush1.msra.mxu0 %v124
    %311 = vmatprep.subr.mxu0 %v123
    %312 = vmatpush1.msra.mxu0 %v122
    %313 = vmatprep.subr.mxu0 %v121
    %314 = vmatpush1.msra.mxu0 %v120
    %315 = vmatprep.subr.mxu0 %v119
    %316 = vmatpush1.msra.mxu0 %v118
    %317 = vmatprep.subr.mxu0 %v117
    %318 = vmatpush1.msra.mxu0 %v116
    %319 = vmatprep.subr.mxu0 %v115
    %320 = vmatpush1.msra.mxu0 %v114
    %321 = vmatprep.subr.mxu0 %v113
    %322 = vmatpush1.msra.mxu0 %v112
    %323 = vmatprep.subr.mxu0 %v111
    %324 = vmatpush1.msra.mxu0 %v110
    %325 = vmatprep.subr.mxu0 %v109
    %326 = vmatpush1.msra.mxu0 %v108
    %327 = vmatprep.subr.mxu0 %v107
    %328 = vmatpush1.msra.mxu0 %v106
    %329 = vmatprep.subr.mxu0 %v105
    %330 = vmatpush1.msra.mxu0 %v104
    %331 = vmatprep.subr.mxu0 %v103
    %332 = vmatpush1.msra.mxu0 %v102
    %333 = vmatprep.subr.mxu0 %v101
    %334 = vmatpush1.msra.mxu0 %v100
    %335 = vmatprep.subr.mxu0 %v99
    %336 = vmatpush1.msra.mxu0 %v98
    %337 = vmatprep.subr.mxu0 %v97
    %338 = vmatpush1.msra.mxu0 %v96
    %339 = vmatprep.subr.mxu0 %v159
    %340 = vmatpush2.msra.mxu0 %v158
    %341 = vmatprep.subr.mxu0 %v157
    %342 = vmatpush2.msra.mxu0 %v156
    %343 = vmatprep.subr.mxu0 %v155
    %344 = vmatpush2.msra.mxu0 %v154
    %345 = vmatprep.subr.mxu0 %v153
    %346 = vmatpush2.msra.mxu0 %v152
    %347 = vmatprep.subr.mxu0 %v151
    %348 = vmatpush2.msra.mxu0 %v150
    %349 = vmatprep.subr.mxu0 %v149
    %350 = vmatpush2.msra.mxu0 %v148
    %351 = vmatprep.subr.mxu0 %v147
    %352 = vmatpush2.msra.mxu0 %v146
    %353 = vmatprep.subr.mxu0 %v145
    %354 = vmatpush2.msra.mxu0 %v144
    %355 = vmatprep.subr.mxu0 %v143
    %356 = vmatpush2.msra.mxu0 %v142
    %357 = vmatprep.subr.mxu0 %v141
    %358 = vmatpush2.msra.mxu0 %v140
    %359 = vmatprep.subr.mxu0 %v139
    %360 = vmatpush2.msra.mxu0 %v138
    %361 = vmatprep.subr.mxu0 %v137
    %362 = vmatpush2.msra.mxu0 %v136
    %363 = vmatprep.subr.mxu0 %v135
    %364 = vmatpush2.msra.mxu0 %v134
    %365 = vmatprep.subr.mxu0 %v133
    %366 = vmatpush2.msra.mxu0 %v132
    %367 = vmatprep.subr.mxu0 %v131
    %368 = vmatpush2.msra.mxu0 %v130
    %369 = vmatprep.subr.mxu0 %v129
    %370 = vmatpush2.msra.mxu0 %v128
    %371 = vmatprep.mubr.f32.mxu0 %v29
    %372 = vmatmul.mubr.f32.gmra.mxu0 %v28
    %v373 = vpop.f32.mrf.mxu0
    %v374 = vadd.f32 %v303, %v373
    %v375 = vpop.f32.mrf.mxu0
    %v376 = vadd.f32 %v305, %v375
    %377 = vdwg.mxu0
    %378 = vmatprep.subr.mxu0 %v191
    %379 = vmatpush1.msra.mxu0 %v190
    %380 = vmatprep.subr.mxu0 %v189
    %381 = vmatpush1.msra.mxu0 %v188
    %382 = vmatprep.subr.mxu0 %v187
    %383 = vmatpush1.msra.mxu0 %v186
    %384 = vmatprep.subr.mxu0 %v185
    %385 = vmatpush1.msra.mxu0 %v184
    %386 = vmatprep.subr.mxu0 %v183
    %387 = vmatpush1.msra.mxu0 %v182
    %388 = vmatprep.subr.mxu0 %v181
    %389 = vmatpush1.msra.mxu0 %v180
    %390 = vmatprep.subr.mxu0 %v179
    %391 = vmatpush1.msra.mxu0 %v178
    %392 = vmatprep.subr.mxu0 %v177
    %393 = vmatpush1.msra.mxu0 %v176
    %394 = vmatprep.subr.mxu0 %v175
    %395 = vmatpush1.msra.mxu0 %v174
    %396 = vmatprep.subr.mxu0 %v173
    %397 = vmatpush1.msra.mxu0 %v172
    %398 = vmatprep.subr.mxu0 %v171
    %399 = vmatpush1.msra.mxu0 %v170
    %400 = vmatprep.subr.mxu0 %v169
    %401 = vmatpush1.msra.mxu0 %v168
    %402 = vmatprep.subr.mxu0 %v167
    %403 = vmatpush1.msra.mxu0 %v166
    %404 = vmatprep.subr.mxu0 %v165
    %405 = vmatpush1.msra.mxu0 %v164
    %406 = vmatprep.subr.mxu0 %v163
    %407 = vmatpush1.msra.mxu0 %v162
    %408 = vmatprep.subr.mxu0 %v161
    %409 = vmatpush1.msra.mxu0 %v160
    %410 = vmatprep.subr.mxu0 %v223
    %411 = vmatpush2.msra.mxu0 %v222
    %412 = vmatprep.subr.mxu0 %v221
    %413 = vmatpush2.msra.mxu0 %v220
    %414 = vmatprep.subr.mxu0 %v219
    %415 = vmatpush2.msra.mxu0 %v218
    %416 = vmatprep.subr.mxu0 %v217
    %417 = vmatpush2.msra.mxu0 %v216
    %418 = vmatprep.subr.mxu0 %v215
    %419 = vmatpush2.msra.mxu0 %v214
    %420 = vmatprep.subr.mxu0 %v213
    %421 = vmatpush2.msra.mxu0 %v212
    %422 = vmatprep.subr.mxu0 %v211
    %423 = vmatpush2.msra.mxu0 %v210
    %424 = vmatprep.subr.mxu0 %v209
    %425 = vmatpush2.msra.mxu0 %v208
    %426 = vmatprep.subr.mxu0 %v207
    %427 = vmatpush2.msra.mxu0 %v206
    %428 = vmatprep.subr.mxu0 %v205
    %429 = vmatpush2.msra.mxu0 %v204
    %430 = vmatprep.subr.mxu0 %v203
    %431 = vmatpush2.msra.mxu0 %v202
    %432 = vmatprep.subr.mxu0 %v201
    %433 = vmatpush2.msra.mxu0 %v200
    %434 = vmatprep.subr.mxu0 %v199
    %435 = vmatpush2.msra.mxu0 %v198
    %436 = vmatprep.subr.mxu0 %v197
    %437 = vmatpush2.msra.mxu0 %v196
    %438 = vmatprep.subr.mxu0 %v195
    %439 = vmatpush2.msra.mxu0 %v194
    %440 = vmatprep.subr.mxu0 %v193
    %441 = vmatpush2.msra.mxu0 %v192
    %442 = vmatprep.mubr.f32.mxu0 %v31
    %443 = vmatmul.mubr.f32.gmra.mxu0 %v30
    %v444 = vpop.f32.mrf.mxu0
    %v445 = vadd.f32 %v374, %v444
    %v446 = vpop.f32.mrf.mxu0
    %v447 = vadd.f32 %v376, %v446
    %448 = vdwg.mxu0
    %449 = vst [vmem:[#allocation2] sm:$0xff] %v445
    %vm450 = vcmask 261120
    %451 = vst.msk [vmem:[#allocation2 + $0x8] sm:$0xff] %vm450, %v447
    %v452 = vld [vmem:[%s2] sm:$0xff]
    %v453 = vld [vmem:[%s2 + $0x8] sm:$0xff]
    %v454 = vld [vmem:[%s2 + $0x10] sm:$0xff]
    %v455 = vld [vmem:[%s2 + $0x18] sm:$0xff]
    %v456 = vld [vmem:[%s2 + $0x20] sm:$0xff]
    %v457 = vld [vmem:[%s2 + $0x28] sm:$0xff]
    %v458 = vld [vmem:[%s2 + $0x30] sm:$0xff]
    %v459 = vld [vmem:[%s2 + $0x38] sm:$0xff]
    %v460 = vld [vmem:[%s2 + $0x40] sm:$0xff]
    %v461 = vld [vmem:[%s2 + $0x48] sm:$0xff]
    %v462 = vld [vmem:[%s4] sm:$0x1]
    %v463 = vld [vmem:[#allocation2] ss:$8 sm:$0x3]
    %vm464 = vcmask 326656
    %v466 = vsel %vm464, 0.0, 0
    %468 = vmatprep.subr.mxu0 0.0
    %469 = vmatpush1.msra.mxu0 0.0
    %470 = vmatprep.subr.mxu0 0.0
    %471 = vmatpush1.msra.mxu0 0.0
    %472 = vmatprep.subr.mxu0 0.0
    %473 = vmatpush1.msra.mxu0 0.0
    %474 = vmatprep.subr.mxu0 0.0
    %475 = vmatpush1.msra.mxu0 0.0
    %476 = vmatprep.subr.mxu0 0.0
    %477 = vmatpush1.msra.mxu0 0.0
    %478 = vmatprep.subr.mxu0 0.0
    %479 = vmatpush1.msra.mxu0 0.0
    %480 = vmatprep.subr.mxu0 0.0
    %481 = vmatpush1.msra.mxu0 0.0
    %482 = vmatprep.subr.mxu0 0.0
    %483 = vmatpush1.msra.mxu0 0.0
    %484 = vmatprep.subr.mxu0 0.0
    %485 = vmatpush1.msra.mxu0 0.0
    %486 = vmatprep.subr.mxu0 0.0
    %487 = vmatpush1.msra.mxu0 0.0
    %488 = vmatprep.subr.mxu0 0.0
    %489 = vmatpush1.msra.mxu0 0.0
    %490 = vmatprep.subr.mxu0 %v461
    %491 = vmatpush1.msra.mxu0 %v460
    %492 = vmatprep.subr.mxu0 %v459
    %493 = vmatpush1.msra.mxu0 %v458
    %494 = vmatprep.subr.mxu0 %v457
    %495 = vmatpush1.msra.mxu0 %v456
    %496 = vmatprep.subr.mxu0 %v455
    %497 = vmatpush1.msra.mxu0 %v454
    %498 = vmatprep.subr.mxu0 %v453
    %499 = vmatpush1.msra.mxu0 %v452
    %500 = vmatprep.subr.mxu0 0.0
    %501 = vmatpush2.msra.mxu0 0.0
    %502 = vmatprep.subr.mxu0 0.0
    %503 = vmatpush2.msra.mxu0 0.0
    %504 = vmatprep.subr.mxu0 0.0
    %505 = vmatpush2.msra.mxu0 0.0
    %506 = vmatprep.subr.mxu0 0.0
    %507 = vmatpush2.msra.mxu0 0.0
    %508 = vmatprep.subr.mxu0 0.0
    %509 = vmatpush2.msra.mxu0 0.0
    %510 = vmatprep.subr.mxu0 0.0
    %511 = vmatpush2.msra.mxu0 0.0
    %512 = vmatprep.subr.mxu0 0.0
    %513 = vmatpush2.msra.mxu0 0.0
    %514 = vmatprep.subr.mxu0 0.0
    %515 = vmatpush2.msra.mxu0 0.0
    %516 = vmatprep.subr.mxu0 0.0
    %517 = vmatpush2.msra.mxu0 0.0
    %518 = vmatprep.subr.mxu0 0.0
    %519 = vmatpush2.msra.mxu0 0.0
    %520 = vmatprep.subr.mxu0 0.0
    %521 = vmatpush2.msra.mxu0 0.0
    %522 = vmatprep.subr.mxu0 0.0
    %523 = vmatpush2.msra.mxu0 0.0
    %524 = vmatprep.subr.mxu0 0.0
    %525 = vmatpush2.msra.mxu0 0.0
    %526 = vmatprep.subr.mxu0 0.0
    %527 = vmatpush2.msra.mxu0 0.0
    %528 = vmatprep.subr.mxu0 0.0
    %529 = vmatpush2.msra.mxu0 0.0
    %530 = vmatprep.subr.mxu0 0.0
    %531 = vmatpush2.msra.mxu0 0.0
    %532 = vmatprep.mubr.f32.mxu0 0.0
    %533 = vmatmul.mubr.f32.gmra.mxu0 %v466
    %v534 = vpop.f32.mrf.mxu0
    %v535 = vadd.f32 0.0, %v534
    %v536 = vpop.f32.mrf.mxu0
    %v537 = vadd.f32 0.0, %v536
    %538 = vdwg.mxu0
    %v541 = vcombine.low %v535, %v537
    %v543 = vunpack.c.l.s4 1966171168
    %v544 = vunpack.c.0.s8 %v543
    %v545 = vlaneseq
    %v546 = vshrl.u32 %v545, 7
    %v547 = vsub.s32 %v544, %v546
    %v548 = vrot.slane %v541, %v547
    %v550 = vunpack.c.l.s4 1966171168
    %v551 = vunpack.c.0.s8 %v550
    %v552 = vlaneseq
    %v553 = vshrl.u32 %v552, 7
    %v554 = vsub.s32 %v551, %v553
    %v555 = vrot.slane %v548, %v554
    %v557 = vadd.f32 %v463, %v555
    %v558 = vxor.u32 %v557, 2147483648
    %v559 = vmul.f32 %v558, 1.442695
    %v560 = vpow.pop %v559
    %v561 = vadd.f32 %v560, 1.0
    %v562 = vrcp.pop %v561
    %v563 = vmul.f32 1.0, %v562
    %v564 = vtanh.pop %v557
    %v565 = vmul.f32 %v563, 0.0
    %567 = vrot.lane.b32.xlu0 %v564, 8
    %v568 = vpop.permute.xlu0 %567
    %v569 = vrot.slane %v568, 1
    %vm570 = vcmask 64512
    %v571 = vsel %vm570, %v568, %v569
    %v573 = vmul.f32 %v563, %v571
    %575 = vrot.lane.b32.xlu0 %v573, 40
    %v576 = vpop.permute.xlu0 %575
    %v578 = vadd.f32 %v565, %v576
    %v579 = vtanh.pop %v578
    %581 = vrot.lane.b32.xlu0 %v579, 40
    %v582 = vpop.permute.xlu0 %581
    %v584 = vmul.f32 %v563, %v582
    %s585 = scalar_lea.vmem [#allocation2], 1
    %v586 = vld [vmem:[%s585] ss:$8 sm:$0x3]
    %v588 = vlaneseq
    %v589 = vshrl.u32 %v588, 7
    %v590 = vsub.s32 0, %v589
    %v591 = vrot.slane %v584, %v590
    %592 = vrot.lane.b32.xlu0 %v591, 48
    %v593 = vpop.permute.xlu0 %592
    %v594 = vsel %vm464, %v593, 0
    %596 = vmatprep.subr.mxu0 0.0
    %597 = vmatpush1.msra.mxu0 0.0
    %598 = vmatprep.subr.mxu0 0.0
    %599 = vmatpush1.msra.mxu0 0.0
    %600 = vmatprep.subr.mxu0 0.0
    %601 = vmatpush1.msra.mxu0 0.0
    %602 = vmatprep.subr.mxu0 0.0
    %603 = vmatpush1.msra.mxu0 0.0
    %604 = vmatprep.subr.mxu0 0.0
    %605 = vmatpush1.msra.mxu0 0.0
    %606 = vmatprep.subr.mxu0 0.0
    %607 = vmatpush1.msra.mxu0 0.0
    %608 = vmatprep.subr.mxu0 0.0
    %609 = vmatpush1.msra.mxu0 0.0
    %610 = vmatprep.subr.mxu0 0.0
    %611 = vmatpush1.msra.mxu0 0.0
    %612 = vmatprep.subr.mxu0 0.0
    %613 = vmatpush1.msra.mxu0 0.0
    %614 = vmatprep.subr.mxu0 0.0
    %615 = vmatpush1.msra.mxu0 0.0
    %616 = vmatprep.subr.mxu0 0.0
    %617 = vmatpush1.msra.mxu0 0.0
    %618 = vmatprep.subr.mxu0 %v461
    %619 = vmatpush1.msra.mxu0 %v460
    %620 = vmatprep.subr.mxu0 %v459
    %621 = vmatpush1.msra.mxu0 %v458
    %622 = vmatprep.subr.mxu0 %v457
    %623 = vmatpush1.msra.mxu0 %v456
    %624 = vmatprep.subr.mxu0 %v455
    %625 = vmatpush1.msra.mxu0 %v454
    %626 = vmatprep.subr.mxu0 %v453
    %627 = vmatpush1.msra.mxu0 %v452
    %628 = vmatprep.subr.mxu0 0.0
    %629 = vmatpush2.msra.mxu0 0.0
    %630 = vmatprep.subr.mxu0 0.0
    %631 = vmatpush2.msra.mxu0 0.0
    %632 = vmatprep.subr.mxu0 0.0
    %633 = vmatpush2.msra.mxu0 0.0
    %634 = vmatprep.subr.mxu0 0.0
    %635 = vmatpush2.msra.mxu0 0.0
    %636 = vmatprep.subr.mxu0 0.0
    %637 = vmatpush2.msra.mxu0 0.0
    %638 = vmatprep.subr.mxu0 0.0
    %639 = vmatpush2.msra.mxu0 0.0
    %640 = vmatprep.subr.mxu0 0.0
    %641 = vmatpush2.msra.mxu0 0.0
    %642 = vmatprep.subr.mxu0 0.0
    %643 = vmatpush2.msra.mxu0 0.0
    %644 = vmatprep.subr.mxu0 0.0
    %645 = vmatpush2.msra.mxu0 0.0
    %646 = vmatprep.subr.mxu0 0.0
    %647 = vmatpush2.msra.mxu0 0.0
    %648 = vmatprep.subr.mxu0 0.0
    %649 = vmatpush2.msra.mxu0 0.0
    %650 = vmatprep.subr.mxu0 0.0
    %651 = vmatpush2.msra.mxu0 0.0
    %652 = vmatprep.subr.mxu0 0.0
    %653 = vmatpush2.msra.mxu0 0.0
    %654 = vmatprep.subr.mxu0 0.0
    %655 = vmatpush2.msra.mxu0 0.0
    %656 = vmatprep.subr.mxu0 0.0
    %657 = vmatpush2.msra.mxu0 0.0
    %658 = vmatprep.subr.mxu0 0.0
    %659 = vmatpush2.msra.mxu0 0.0
    %660 = vmatprep.mubr.f32.mxu0 0.0
    %661 = vmatmul.mubr.f32.gmra.mxu0 %v594
    %v662 = vpop.f32.mrf.mxu0
    %v663 = vadd.f32 0.0, %v662
    %v664 = vpop.f32.mrf.mxu0
    %v665 = vadd.f32 0.0, %v664
    %666 = vdwg.mxu0
    %v669 = vcombine.low %v663, %v665
    %v671 = vunpack.c.l.s4 1966171168
    %v672 = vunpack.c.0.s8 %v671
    %v673 = vlaneseq
    %v674 = vshrl.u32 %v673, 7
    %v675 = vsub.s32 %v672, %v674
    %v676 = vrot.slane %v669, %v675
    %v678 = vunpack.c.l.s4 1966171168
    %v679 = vunpack.c.0.s8 %v678
    %v680 = vlaneseq
    %v681 = vshrl.u32 %v680, 7
    %v682 = vsub.s32 %v679, %v681
    %v683 = vrot.slane %v676, %v682
    %v685 = vadd.f32 %v586, %v683
    %v686 = vxor.u32 %v685, 2147483648
    %v687 = vmul.f32 %v686, 1.442695
    %v688 = vpow.pop %v687
    %v689 = vadd.f32 %v688, 1.0
    %v690 = vrcp.pop %v689
    %v691 = vmul.f32 1.0, %v690
    %v692 = vtanh.pop %v685
    %v693 = vmul.f32 %v691, %v578
    %695 = vrot.lane.b32.xlu0 %v692, 8
    %v696 = vpop.permute.xlu0 %695
    %v697 = vrot.slane %v696, 1
    %v698 = vsel %vm570, %v696, %v697
    %v700 = vmul.f32 %v691, %v698
    %702 = vrot.lane.b32.xlu0 %v700, 40
    %v703 = vpop.permute.xlu0 %702
    %v705 = vadd.f32 %v693, %v703
    %v706 = vtanh.pop %v705
    %708 = vrot.lane.b32.xlu0 %v706, 40
    %v709 = vpop.permute.xlu0 %708
    %v711 = vmul.f32 %v691, %v709
    %v712 = vmax.f32 %v584, %v711
    %s713 = scalar_lea.vmem [#allocation2], 2
    %v714 = vld [vmem:[%s713] ss:$8 sm:$0x3]
    %v716 = vlaneseq
    %v717 = vshrl.u32 %v716, 7
    %v718 = vsub.s32 0, %v717
    %v719 = vrot.slane %v711, %v718
    %720 = vrot.lane.b32.xlu0 %v719, 48
    %v721 = vpop.permute.xlu0 %720
    %v722 = vsel %vm464, %v721, 0
    %724 = vmatprep.subr.mxu0 0.0
    %725 = vmatpush1.msra.mxu0 0.0
    %726 = vmatprep.subr.mxu0 0.0
    %727 = vmatpush1.msra.mxu0 0.0
    %728 = vmatprep.subr.mxu0 0.0
    %729 = vmatpush1.msra.mxu0 0.0
    %730 = vmatprep.subr.mxu0 0.0
    %731 = vmatpush1.msra.mxu0 0.0
    %732 = vmatprep.subr.mxu0 0.0
    %733 = vmatpush1.msra.mxu0 0.0
    %734 = vmatprep.subr.mxu0 0.0
    %735 = vmatpush1.msra.mxu0 0.0
    %736 = vmatprep.subr.mxu0 0.0
    %737 = vmatpush1.msra.mxu0 0.0
    %738 = vmatprep.subr.mxu0 0.0
    %739 = vmatpush1.msra.mxu0 0.0
    %740 = vmatprep.subr.mxu0 0.0
    %741 = vmatpush1.msra.mxu0 0.0
    %742 = vmatprep.subr.mxu0 0.0
    %743 = vmatpush1.msra.mxu0 0.0
    %744 = vmatprep.subr.mxu0 0.0
    %745 = vmatpush1.msra.mxu0 0.0
    %746 = vmatprep.subr.mxu0 %v461
    %747 = vmatpush1.msra.mxu0 %v460
    %748 = vmatprep.subr.mxu0 %v459
    %749 = vmatpush1.msra.mxu0 %v458
    %750 = vmatprep.subr.mxu0 %v457
    %751 = vmatpush1.msra.mxu0 %v456
    %752 = vmatprep.subr.mxu0 %v455
    %753 = vmatpush1.msra.mxu0 %v454
    %754 = vmatprep.subr.mxu0 %v453
    %755 = vmatpush1.msra.mxu0 %v452
    %756 = vmatprep.subr.mxu0 0.0
    %757 = vmatpush2.msra.mxu0 0.0
    %758 = vmatprep.subr.mxu0 0.0
    %759 = vmatpush2.msra.mxu0 0.0
    %760 = vmatprep.subr.mxu0 0.0
    %761 = vmatpush2.msra.mxu0 0.0
    %762 = vmatprep.subr.mxu0 0.0
    %763 = vmatpush2.msra.mxu0 0.0
    %764 = vmatprep.subr.mxu0 0.0
    %765 = vmatpush2.msra.mxu0 0.0
    %766 = vmatprep.subr.mxu0 0.0
    %767 = vmatpush2.msra.mxu0 0.0
    %768 = vmatprep.subr.mxu0 0.0
    %769 = vmatpush2.msra.mxu0 0.0
    %770 = vmatprep.subr.mxu0 0.0
    %771 = vmatpush2.msra.mxu0 0.0
    %772 = vmatprep.subr.mxu0 0.0
    %773 = vmatpush2.msra.mxu0 0.0
    %774 = vmatprep.subr.mxu0 0.0
    %775 = vmatpush2.msra.mxu0 0.0
    %776 = vmatprep.subr.mxu0 0.0
    %777 = vmatpush2.msra.mxu0 0.0
    %778 = vmatprep.subr.mxu0 0.0
    %779 = vmatpush2.msra.mxu0 0.0
    %780 = vmatprep.subr.mxu0 0.0
    %781 = vmatpush2.msra.mxu0 0.0
    %782 = vmatprep.subr.mxu0 0.0
    %783 = vmatpush2.msra.mxu0 0.0
    %784 = vmatprep.subr.mxu0 0.0
    %785 = vmatpush2.msra.mxu0 0.0
    %786 = vmatprep.subr.mxu0 0.0
    %787 = vmatpush2.msra.mxu0 0.0
    %788 = vmatprep.mubr.f32.mxu0 0.0
    %789 = vmatmul.mubr.f32.gmra.mxu0 %v722
    %v790 = vpop.f32.mrf.mxu0
    %v791 = vadd.f32 0.0, %v790
    %v792 = vpop.f32.mrf.mxu0
    %v793 = vadd.f32 0.0, %v792
    %794 = vdwg.mxu0
    %v797 = vcombine.low %v791, %v793
    %v799 = vunpack.c.l.s4 1966171168
    %v800 = vunpack.c.0.s8 %v799
    %v801 = vlaneseq
    %v802 = vshrl.u32 %v801, 7
    %v803 = vsub.s32 %v800, %v802
    %v804 = vrot.slane %v797, %v803
    %v806 = vunpack.c.l.s4 1966171168
    %v807 = vunpack.c.0.s8 %v806
    %v808 = vlaneseq
    %v809 = vshrl.u32 %v808, 7
    %v810 = vsub.s32 %v807, %v809
    %v811 = vrot.slane %v804, %v810
    %v813 = vadd.f32 %v714, %v811
    %v814 = vxor.u32 %v813, 2147483648
    %v815 = vmul.f32 %v814, 1.442695
    %v816 = vpow.pop %v815
    %v817 = vadd.f32 %v816, 1.0
    %v818 = vrcp.pop %v817
    %v819 = vmul.f32 1.0, %v818
    %v820 = vtanh.pop %v813
    %v821 = vmul.f32 %v819, %v705
    %823 = vrot.lane.b32.xlu0 %v820, 8
    %v824 = vpop.permute.xlu0 %823
    %v825 = vrot.slane %v824, 1
    %v826 = vsel %vm570, %v824, %v825
    %v828 = vmul.f32 %v819, %v826
    %830 = vrot.lane.b32.xlu0 %v828, 40
    %v831 = vpop.permute.xlu0 %830
    %v833 = vadd.f32 %v821, %v831
    %v834 = vtanh.pop %v833
    %836 = vrot.lane.b32.xlu0 %v834, 40
    %v837 = vpop.permute.xlu0 %836
    %v839 = vmul.f32 %v819, %v837
    %v840 = vmax.f32 %v712, %v839
    %s841 = scalar_lea.vmem [#allocation2], 3
    %v842 = vld [vmem:[%s841] ss:$8 sm:$0x3]
    %v844 = vlaneseq
    %v845 = vshrl.u32 %v844, 7
    %v846 = vsub.s32 0, %v845
    %v847 = vrot.slane %v839, %v846
    %848 = vrot.lane.b32.xlu0 %v847, 48
    %v849 = vpop.permute.xlu0 %848
    %v850 = vsel %vm464, %v849, 0
    %852 = vmatprep.subr.mxu0 0.0
    %853 = vmatpush1.msra.mxu0 0.0
    %854 = vmatprep.subr.mxu0 0.0
    %855 = vmatpush1.msra.mxu0 0.0
    %856 = vmatprep.subr.mxu0 0.0
    %857 = vmatpush1.msra.mxu0 0.0
    %858 = vmatprep.subr.mxu0 0.0
    %859 = vmatpush1.msra.mxu0 0.0
    %860 = vmatprep.subr.mxu0 0.0
    %861 = vmatpush1.msra.mxu0 0.0
    %862 = vmatprep.subr.mxu0 0.0
    %863 = vmatpush1.msra.mxu0 0.0
    %864 = vmatprep.subr.mxu0 0.0
    %865 = vmatpush1.msra.mxu0 0.0
    %866 = vmatprep.subr.mxu0 0.0
    %867 = vmatpush1.msra.mxu0 0.0
    %868 = vmatprep.subr.mxu0 0.0
    %869 = vmatpush1.msra.mxu0 0.0
    %870 = vmatprep.subr.mxu0 0.0
    %871 = vmatpush1.msra.mxu0 0.0
    %872 = vmatprep.subr.mxu0 0.0
    %873 = vmatpush1.msra.mxu0 0.0
    %874 = vmatprep.subr.mxu0 %v461
    %875 = vmatpush1.msra.mxu0 %v460
    %876 = vmatprep.subr.mxu0 %v459
    %877 = vmatpush1.msra.mxu0 %v458
    %878 = vmatprep.subr.mxu0 %v457
    %879 = vmatpush1.msra.mxu0 %v456
    %880 = vmatprep.subr.mxu0 %v455
    %881 = vmatpush1.msra.mxu0 %v454
    %882 = vmatprep.subr.mxu0 %v453
    %883 = vmatpush1.msra.mxu0 %v452
    %884 = vmatprep.subr.mxu0 0.0
    %885 = vmatpush2.msra.mxu0 0.0
    %886 = vmatprep.subr.mxu0 0.0
    %887 = vmatpush2.msra.mxu0 0.0
    %888 = vmatprep.subr.mxu0 0.0
    %889 = vmatpush2.msra.mxu0 0.0
    %890 = vmatprep.subr.mxu0 0.0
    %891 = vmatpush2.msra.mxu0 0.0
    %892 = vmatprep.subr.mxu0 0.0
    %893 = vmatpush2.msra.mxu0 0.0
    %894 = vmatprep.subr.mxu0 0.0
    %895 = vmatpush2.msra.mxu0 0.0
    %896 = vmatprep.subr.mxu0 0.0
    %897 = vmatpush2.msra.mxu0 0.0
    %898 = vmatprep.subr.mxu0 0.0
    %899 = vmatpush2.msra.mxu0 0.0
    %900 = vmatprep.subr.mxu0 0.0
    %901 = vmatpush2.msra.mxu0 0.0
    %902 = vmatprep.subr.mxu0 0.0
    %903 = vmatpush2.msra.mxu0 0.0
    %904 = vmatprep.subr.mxu0 0.0
    %905 = vmatpush2.msra.mxu0 0.0
    %906 = vmatprep.subr.mxu0 0.0
    %907 = vmatpush2.msra.mxu0 0.0
    %908 = vmatprep.subr.mxu0 0.0
    %909 = vmatpush2.msra.mxu0 0.0
    %910 = vmatprep.subr.mxu0 0.0
    %911 = vmatpush2.msra.mxu0 0.0
    %912 = vmatprep.subr.mxu0 0.0
    %913 = vmatpush2.msra.mxu0 0.0
    %914 = vmatprep.subr.mxu0 0.0
    %915 = vmatpush2.msra.mxu0 0.0
    %916 = vmatprep.mubr.f32.mxu0 0.0
    %917 = vmatmul.mubr.f32.gmra.mxu0 %v850
    %v918 = vpop.f32.mrf.mxu0
    %v919 = vadd.f32 0.0, %v918
    %v920 = vpop.f32.mrf.mxu0
    %v921 = vadd.f32 0.0, %v920
    %922 = vdwg.mxu0
    %v925 = vcombine.low %v919, %v921
    %v927 = vunpack.c.l.s4 1966171168
    %v928 = vunpack.c.0.s8 %v927
    %v929 = vlaneseq
    %v930 = vshrl.u32 %v929, 7
    %v931 = vsub.s32 %v928, %v930
    %v932 = vrot.slane %v925, %v931
    %v934 = vunpack.c.l.s4 1966171168
    %v935 = vunpack.c.0.s8 %v934
    %v936 = vlaneseq
    %v937 = vshrl.u32 %v936, 7
    %v938 = vsub.s32 %v935, %v937
    %v939 = vrot.slane %v932, %v938
    %v941 = vadd.f32 %v842, %v939
    %v942 = vxor.u32 %v941, 2147483648
    %v943 = vmul.f32 %v942, 1.442695
    %v944 = vpow.pop %v943
    %v945 = vadd.f32 %v944, 1.0
    %v946 = vrcp.pop %v945
    %v947 = vmul.f32 1.0, %v946
    %v948 = vtanh.pop %v941
    %v949 = vmul.f32 %v947, %v833
    %951 = vrot.lane.b32.xlu0 %v948, 8
    %v952 = vpop.permute.xlu0 %951
    %v953 = vrot.slane %v952, 1
    %v954 = vsel %vm570, %v952, %v953
    %v956 = vmul.f32 %v947, %v954
    %958 = vrot.lane.b32.xlu0 %v956, 40
    %v959 = vpop.permute.xlu0 %958
    %v961 = vadd.f32 %v949, %v959
    %v962 = vtanh.pop %v961
    %964 = vrot.lane.b32.xlu0 %v962, 40
    %v965 = vpop.permute.xlu0 %964
    %v967 = vmul.f32 %v947, %v965
    %v968 = vmax.f32 %v840, %v967
    %s969 = scalar_lea.vmem [#allocation2], 4
    %v970 = vld [vmem:[%s969] ss:$8 sm:$0x3]
    %v972 = vlaneseq
    %v973 = vshrl.u32 %v972, 7
    %v974 = vsub.s32 0, %v973
    %v975 = vrot.slane %v967, %v974
    %976 = vrot.lane.b32.xlu0 %v975, 48
    %v977 = vpop.permute.xlu0 %976
    %v978 = vsel %vm464, %v977, 0
    %980 = vmatprep.subr.mxu0 0.0
    %981 = vmatpush1.msra.mxu0 0.0
    %982 = vmatprep.subr.mxu0 0.0
    %983 = vmatpush1.msra.mxu0 0.0
    %984 = vmatprep.subr.mxu0 0.0
    %985 = vmatpush1.msra.mxu0 0.0
    %986 = vmatprep.subr.mxu0 0.0
    %987 = vmatpush1.msra.mxu0 0.0
    %988 = vmatprep.subr.mxu0 0.0
    %989 = vmatpush1.msra.mxu0 0.0
    %990 = vmatprep.subr.mxu0 0.0
    %991 = vmatpush1.msra.mxu0 0.0
    %992 = vmatprep.subr.mxu0 0.0
    %993 = vmatpush1.msra.mxu0 0.0
    %994 = vmatprep.subr.mxu0 0.0
    %995 = vmatpush1.msra.mxu0 0.0
    %996 = vmatprep.subr.mxu0 0.0
    %997 = vmatpush1.msra.mxu0 0.0
    %998 = vmatprep.subr.mxu0 0.0
    %999 = vmatpush1.msra.mxu0 0.0
    %1000 = vmatprep.subr.mxu0 0.0
    %1001 = vmatpush1.msra.mxu0 0.0
    %1002 = vmatprep.subr.mxu0 %v461
    %1003 = vmatpush1.msra.mxu0 %v460
    %1004 = vmatprep.subr.mxu0 %v459
    %1005 = vmatpush1.msra.mxu0 %v458
    %1006 = vmatprep.subr.mxu0 %v457
    %1007 = vmatpush1.msra.mxu0 %v456
    %1008 = vmatprep.subr.mxu0 %v455
    %1009 = vmatpush1.msra.mxu0 %v454
    %1010 = vmatprep.subr.mxu0 %v453
    %1011 = vmatpush1.msra.mxu0 %v452
    %1012 = vmatprep.subr.mxu0 0.0
    %1013 = vmatpush2.msra.mxu0 0.0
    %1014 = vmatprep.subr.mxu0 0.0
    %1015 = vmatpush2.msra.mxu0 0.0
    %1016 = vmatprep.subr.mxu0 0.0
    %1017 = vmatpush2.msra.mxu0 0.0
    %1018 = vmatprep.subr.mxu0 0.0
    %1019 = vmatpush2.msra.mxu0 0.0
    %1020 = vmatprep.subr.mxu0 0.0
    %1021 = vmatpush2.msra.mxu0 0.0
    %1022 = vmatprep.subr.mxu0 0.0
    %1023 = vmatpush2.msra.mxu0 0.0
    %1024 = vmatprep.subr.mxu0 0.0
    %1025 = vmatpush2.msra.mxu0 0.0
    %1026 = vmatprep.subr.mxu0 0.0
    %1027 = vmatpush2.msra.mxu0 0.0
    %1028 = vmatprep.subr.mxu0 0.0
    %1029 = vmatpush2.msra.mxu0 0.0
    %1030 = vmatprep.subr.mxu0 0.0
    %1031 = vmatpush2.msra.mxu0 0.0
    %1032 = vmatprep.subr.mxu0 0.0
    %1033 = vmatpush2.msra.mxu0 0.0
    %1034 = vmatprep.subr.mxu0 0.0
    %1035 = vmatpush2.msra.mxu0 0.0
    %1036 = vmatprep.subr.mxu0 0.0
    %1037 = vmatpush2.msra.mxu0 0.0
    %1038 = vmatprep.subr.mxu0 0.0
    %1039 = vmatpush2.msra.mxu0 0.0
    %1040 = vmatprep.subr.mxu0 0.0
    %1041 = vmatpush2.msra.mxu0 0.0
    %1042 = vmatprep.subr.mxu0 0.0
    %1043 = vmatpush2.msra.mxu0 0.0
    %1044 = vmatprep.mubr.f32.mxu0 0.0
    %1045 = vmatmul.mubr.f32.gmra.mxu0 %v978
    %v1046 = vpop.f32.mrf.mxu0
    %v1047 = vadd.f32 0.0, %v1046
    %v1048 = vpop.f32.mrf.mxu0
    %v1049 = vadd.f32 0.0, %v1048
    %1050 = vdwg.mxu0
    %v1053 = vcombine.low %v1047, %v1049
    %v1055 = vunpack.c.l.s4 1966171168
    %v1056 = vunpack.c.0.s8 %v1055
    %v1057 = vlaneseq
    %v1058 = vshrl.u32 %v1057, 7
    %v1059 = vsub.s32 %v1056, %v1058
    %v1060 = vrot.slane %v1053, %v1059
    %v1062 = vunpack.c.l.s4 1966171168
    %v1063 = vunpack.c.0.s8 %v1062
    %v1064 = vlaneseq
    %v1065 = vshrl.u32 %v1064, 7
    %v1066 = vsub.s32 %v1063, %v1065
    %v1067 = vrot.slane %v1060, %v1066
    %v1069 = vadd.f32 %v970, %v1067
    %v1070 = vxor.u32 %v1069, 2147483648
    %v1071 = vmul.f32 %v1070, 1.442695
    %v1072 = vpow.pop %v1071
    %v1073 = vadd.f32 %v1072, 1.0
    %v1074 = vrcp.pop %v1073
    %v1075 = vmul.f32 1.0, %v1074
    %v1076 = vtanh.pop %v1069
    %v1077 = vmul.f32 %v1075, %v961
    %1079 = vrot.lane.b32.xlu0 %v1076, 8
    %v1080 = vpop.permute.xlu0 %1079
    %v1081 = vrot.slane %v1080, 1
    %v1082 = vsel %vm570, %v1080, %v1081
    %v1084 = vmul.f32 %v1075, %v1082
    %1086 = vrot.lane.b32.xlu0 %v1084, 40
    %v1087 = vpop.permute.xlu0 %1086
    %v1089 = vadd.f32 %v1077, %v1087
    %v1090 = vtanh.pop %v1089
    %1092 = vrot.lane.b32.xlu0 %v1090, 40
    %v1093 = vpop.permute.xlu0 %1092
    %v1095 = vmul.f32 %v1075, %v1093
    %v1096 = vmax.f32 %v968, %v1095
    %s1097 = scalar_lea.vmem [#allocation2], 5
    %v1098 = vld [vmem:[%s1097] ss:$8 sm:$0x3]
    %v1100 = vlaneseq
    %v1101 = vshrl.u32 %v1100, 7
    %v1102 = vsub.s32 0, %v1101
    %v1103 = vrot.slane %v1095, %v1102
    %1104 = vrot.lane.b32.xlu0 %v1103, 48
    %v1105 = vpop.permute.xlu0 %1104
    %v1106 = vsel %vm464, %v1105, 0
    %1108 = vmatprep.subr.mxu0 0.0
    %1109 = vmatpush1.msra.mxu0 0.0
    %1110 = vmatprep.subr.mxu0 0.0
    %1111 = vmatpush1.msra.mxu0 0.0
    %1112 = vmatprep.subr.mxu0 0.0
    %1113 = vmatpush1.msra.mxu0 0.0
    %1114 = vmatprep.subr.mxu0 0.0
    %1115 = vmatpush1.msra.mxu0 0.0
    %1116 = vmatprep.subr.mxu0 0.0
    %1117 = vmatpush1.msra.mxu0 0.0
    %1118 = vmatprep.subr.mxu0 0.0
    %1119 = vmatpush1.msra.mxu0 0.0
    %1120 = vmatprep.subr.mxu0 0.0
    %1121 = vmatpush1.msra.mxu0 0.0
    %1122 = vmatprep.subr.mxu0 0.0
    %1123 = vmatpush1.msra.mxu0 0.0
    %1124 = vmatprep.subr.mxu0 0.0
    %1125 = vmatpush1.msra.mxu0 0.0
    %1126 = vmatprep.subr.mxu0 0.0
    %1127 = vmatpush1.msra.mxu0 0.0
    %1128 = vmatprep.subr.mxu0 0.0
    %1129 = vmatpush1.msra.mxu0 0.0
    %1130 = vmatprep.subr.mxu0 %v461
    %1131 = vmatpush1.msra.mxu0 %v460
    %1132 = vmatprep.subr.mxu0 %v459
    %1133 = vmatpush1.msra.mxu0 %v458
    %1134 = vmatprep.subr.mxu0 %v457
    %1135 = vmatpush1.msra.mxu0 %v456
    %1136 = vmatprep.subr.mxu0 %v455
    %1137 = vmatpush1.msra.mxu0 %v454
    %1138 = vmatprep.subr.mxu0 %v453
    %1139 = vmatpush1.msra.mxu0 %v452
    %1140 = vmatprep.subr.mxu0 0.0
    %1141 = vmatpush2.msra.mxu0 0.0
    %1142 = vmatprep.subr.mxu0 0.0
    %1143 = vmatpush2.msra.mxu0 0.0
    %1144 = vmatprep.subr.mxu0 0.0
    %1145 = vmatpush2.msra.mxu0 0.0
    %1146 = vmatprep.subr.mxu0 0.0
    %1147 = vmatpush2.msra.mxu0 0.0
    %1148 = vmatprep.subr.mxu0 0.0
    %1149 = vmatpush2.msra.mxu0 0.0
    %1150 = vmatprep.subr.mxu0 0.0
    %1151 = vmatpush2.msra.mxu0 0.0
    %1152 = vmatprep.subr.mxu0 0.0
    %1153 = vmatpush2.msra.mxu0 0.0
    %1154 = vmatprep.subr.mxu0 0.0
    %1155 = vmatpush2.msra.mxu0 0.0
    %1156 = vmatprep.subr.mxu0 0.0
    %1157 = vmatpush2.msra.mxu0 0.0
    %1158 = vmatprep.subr.mxu0 0.0
    %1159 = vmatpush2.msra.mxu0 0.0
    %1160 = vmatprep.subr.mxu0 0.0
    %1161 = vmatpush2.msra.mxu0 0.0
    %1162 = vmatprep.subr.mxu0 0.0
    %1163 = vmatpush2.msra.mxu0 0.0
    %1164 = vmatprep.subr.mxu0 0.0
    %1165 = vmatpush2.msra.mxu0 0.0
    %1166 = vmatprep.subr.mxu0 0.0
    %1167 = vmatpush2.msra.mxu0 0.0
    %1168 = vmatprep.subr.mxu0 0.0
    %1169 = vmatpush2.msra.mxu0 0.0
    %1170 = vmatprep.subr.mxu0 0.0
    %1171 = vmatpush2.msra.mxu0 0.0
    %1172 = vmatprep.mubr.f32.mxu0 0.0
    %1173 = vmatmul.mubr.f32.gmra.mxu0 %v1106
    %v1174 = vpop.f32.mrf.mxu0
    %v1175 = vadd.f32 0.0, %v1174
    %v1176 = vpop.f32.mrf.mxu0
    %v1177 = vadd.f32 0.0, %v1176
    %1178 = vdwg.mxu0
    %v1181 = vcombine.low %v1175, %v1177
    %v1183 = vunpack.c.l.s4 1966171168
    %v1184 = vunpack.c.0.s8 %v1183
    %v1185 = vlaneseq
    %v1186 = vshrl.u32 %v1185, 7
    %v1187 = vsub.s32 %v1184, %v1186
    %v1188 = vrot.slane %v1181, %v1187
    %v1190 = vunpack.c.l.s4 1966171168
    %v1191 = vunpack.c.0.s8 %v1190
    %v1192 = vlaneseq
    %v1193 = vshrl.u32 %v1192, 7
    %v1194 = vsub.s32 %v1191, %v1193
    %v1195 = vrot.slane %v1188, %v1194
    %v1197 = vadd.f32 %v1098, %v1195
    %v1198 = vxor.u32 %v1197, 2147483648
    %v1199 = vmul.f32 %v1198, 1.442695
    %v1200 = vpow.pop %v1199
    %v1201 = vadd.f32 %v1200, 1.0
    %v1202 = vrcp.pop %v1201
    %v1203 = vmul.f32 1.0, %v1202
    %v1204 = vtanh.pop %v1197
    %v1205 = vmul.f32 %v1203, %v1089
    %1207 = vrot.lane.b32.xlu0 %v1204, 8
    %v1208 = vpop.permute.xlu0 %1207
    %v1209 = vrot.slane %v1208, 1
    %v1210 = vsel %vm570, %v1208, %v1209
    %v1212 = vmul.f32 %v1203, %v1210
    %1214 = vrot.lane.b32.xlu0 %v1212, 40
    %v1215 = vpop.permute.xlu0 %1214
    %v1217 = vadd.f32 %v1205, %v1215
    %v1218 = vtanh.pop %v1217
    %1220 = vrot.lane.b32.xlu0 %v1218, 40
    %v1221 = vpop.permute.xlu0 %1220
    %v1223 = vmul.f32 %v1203, %v1221
    %v1224 = vmax.f32 %v1096, %v1223
    %s1225 = scalar_lea.vmem [#allocation2], 6
    %v1226 = vld [vmem:[%s1225] ss:$8 sm:$0x3]
    %v1228 = vlaneseq
    %v1229 = vshrl.u32 %v1228, 7
    %v1230 = vsub.s32 0, %v1229
    %v1231 = vrot.slane %v1223, %v1230
    %1232 = vrot.lane.b32.xlu0 %v1231, 48
    %v1233 = vpop.permute.xlu0 %1232
    %v1234 = vsel %vm464, %v1233, 0
    %1236 = vmatprep.subr.mxu0 0.0
    %1237 = vmatpush1.msra.mxu0 0.0
    %1238 = vmatprep.subr.mxu0 0.0
    %1239 = vmatpush1.msra.mxu0 0.0
    %1240 = vmatprep.subr.mxu0 0.0
    %1241 = vmatpush1.msra.mxu0 0.0
    %1242 = vmatprep.subr.mxu0 0.0
    %1243 = vmatpush1.msra.mxu0 0.0
    %1244 = vmatprep.subr.mxu0 0.0
    %1245 = vmatpush1.msra.mxu0 0.0
    %1246 = vmatprep.subr.mxu0 0.0
    %1247 = vmatpush1.msra.mxu0 0.0
    %1248 = vmatprep.subr.mxu0 0.0
    %1249 = vmatpush1.msra.mxu0 0.0
    %1250 = vmatprep.subr.mxu0 0.0
    %1251 = vmatpush1.msra.mxu0 0.0
    %1252 = vmatprep.subr.mxu0 0.0
    %1253 = vmatpush1.msra.mxu0 0.0
    %1254 = vmatprep.subr.mxu0 0.0
    %1255 = vmatpush1.msra.mxu0 0.0
    %1256 = vmatprep.subr.mxu0 0.0
    %1257 = vmatpush1.msra.mxu0 0.0
    %1258 = vmatprep.subr.mxu0 %v461
    %1259 = vmatpush1.msra.mxu0 %v460
    %1260 = vmatprep.subr.mxu0 %v459
    %1261 = vmatpush1.msra.mxu0 %v458
    %1262 = vmatprep.subr.mxu0 %v457
    %1263 = vmatpush1.msra.mxu0 %v456
    %1264 = vmatprep.subr.mxu0 %v455
    %1265 = vmatpush1.msra.mxu0 %v454
    %1266 = vmatprep.subr.mxu0 %v453
    %1267 = vmatpush1.msra.mxu0 %v452
    %1268 = vmatprep.subr.mxu0 0.0
    %1269 = vmatpush2.msra.mxu0 0.0
    %1270 = vmatprep.subr.mxu0 0.0
    %1271 = vmatpush2.msra.mxu0 0.0
    %1272 = vmatprep.subr.mxu0 0.0
    %1273 = vmatpush2.msra.mxu0 0.0
    %1274 = vmatprep.subr.mxu0 0.0
    %1275 = vmatpush2.msra.mxu0 0.0
    %1276 = vmatprep.subr.mxu0 0.0
    %1277 = vmatpush2.msra.mxu0 0.0
    %1278 = vmatprep.subr.mxu0 0.0
    %1279 = vmatpush2.msra.mxu0 0.0
    %1280 = vmatprep.subr.mxu0 0.0
    %1281 = vmatpush2.msra.mxu0 0.0
    %1282 = vmatprep.subr.mxu0 0.0
    %1283 = vmatpush2.msra.mxu0 0.0
    %1284 = vmatprep.subr.mxu0 0.0
    %1285 = vmatpush2.msra.mxu0 0.0
    %1286 = vmatprep.subr.mxu0 0.0
    %1287 = vmatpush2.msra.mxu0 0.0
    %1288 = vmatprep.subr.mxu0 0.0
    %1289 = vmatpush2.msra.mxu0 0.0
    %1290 = vmatprep.subr.mxu0 0.0
    %1291 = vmatpush2.msra.mxu0 0.0
    %1292 = vmatprep.subr.mxu0 0.0
    %1293 = vmatpush2.msra.mxu0 0.0
    %1294 = vmatprep.subr.mxu0 0.0
    %1295 = vmatpush2.msra.mxu0 0.0
    %1296 = vmatprep.subr.mxu0 0.0
    %1297 = vmatpush2.msra.mxu0 0.0
    %1298 = vmatprep.subr.mxu0 0.0
    %1299 = vmatpush2.msra.mxu0 0.0
    %1300 = vmatprep.mubr.f32.mxu0 0.0
    %1301 = vmatmul.mubr.f32.gmra.mxu0 %v1234
    %v1302 = vpop.f32.mrf.mxu0
    %v1303 = vadd.f32 0.0, %v1302
    %v1304 = vpop.f32.mrf.mxu0
    %v1305 = vadd.f32 0.0, %v1304
    %1306 = vdwg.mxu0
    %v1309 = vcombine.low %v1303, %v1305
    %v1311 = vunpack.c.l.s4 1966171168
    %v1312 = vunpack.c.0.s8 %v1311
    %v1313 = vlaneseq
    %v1314 = vshrl.u32 %v1313, 7
    %v1315 = vsub.s32 %v1312, %v1314
    %v1316 = vrot.slane %v1309, %v1315
    %v1318 = vunpack.c.l.s4 1966171168
    %v1319 = vunpack.c.0.s8 %v1318
    %v1320 = vlaneseq
    %v1321 = vshrl.u32 %v1320, 7
    %v1322 = vsub.s32 %v1319, %v1321
    %v1323 = vrot.slane %v1316, %v1322
    %v1325 = vadd.f32 %v1226, %v1323
    %v1326 = vxor.u32 %v1325, 2147483648
    %v1327 = vmul.f32 %v1326, 1.442695
    %v1328 = vpow.pop %v1327
    %v1329 = vadd.f32 %v1328, 1.0
    %v1330 = vrcp.pop %v1329
    %v1331 = vmul.f32 1.0, %v1330
    %v1332 = vtanh.pop %v1325
    %v1333 = vmul.f32 %v1331, %v1217
    %1335 = vrot.lane.b32.xlu0 %v1332, 8
    %v1336 = vpop.permute.xlu0 %1335
    %v1337 = vrot.slane %v1336, 1
    %v1338 = vsel %vm570, %v1336, %v1337
    %v1340 = vmul.f32 %v1331, %v1338
    %1342 = vrot.lane.b32.xlu0 %v1340, 40
    %v1343 = vpop.permute.xlu0 %1342
    %v1345 = vadd.f32 %v1333, %v1343
    %v1346 = vtanh.pop %v1345
    %1348 = vrot.lane.b32.xlu0 %v1346, 40
    %v1349 = vpop.permute.xlu0 %1348
    %v1351 = vmul.f32 %v1331, %v1349
    %v1352 = vmax.f32 %v1224, %v1351
    %s1353 = scalar_lea.vmem [#allocation2], 7
    %v1354 = vld [vmem:[%s1353] ss:$8 sm:$0x3]
    %v1356 = vlaneseq
    %v1357 = vshrl.u32 %v1356, 7
    %v1358 = vsub.s32 0, %v1357
    %v1359 = vrot.slane %v1351, %v1358
    %1360 = vrot.lane.b32.xlu0 %v1359, 48
    %v1361 = vpop.permute.xlu0 %1360
    %v1362 = vsel %vm464, %v1361, 0
    %1364 = vmatprep.subr.mxu0 0.0
    %1365 = vmatpush1.msra.mxu0 0.0
    %1366 = vmatprep.subr.mxu0 0.0
    %1367 = vmatpush1.msra.mxu0 0.0
    %1368 = vmatprep.subr.mxu0 0.0
    %1369 = vmatpush1.msra.mxu0 0.0
    %1370 = vmatprep.subr.mxu0 0.0
    %1371 = vmatpush1.msra.mxu0 0.0
    %1372 = vmatprep.subr.mxu0 0.0
    %1373 = vmatpush1.msra.mxu0 0.0
    %1374 = vmatprep.subr.mxu0 0.0
    %1375 = vmatpush1.msra.mxu0 0.0
    %1376 = vmatprep.subr.mxu0 0.0
    %1377 = vmatpush1.msra.mxu0 0.0
    %1378 = vmatprep.subr.mxu0 0.0
    %1379 = vmatpush1.msra.mxu0 0.0
    %1380 = vmatprep.subr.mxu0 0.0
    %1381 = vmatpush1.msra.mxu0 0.0
    %1382 = vmatprep.subr.mxu0 0.0
    %1383 = vmatpush1.msra.mxu0 0.0
    %1384 = vmatprep.subr.mxu0 0.0
    %1385 = vmatpush1.msra.mxu0 0.0
    %1386 = vmatprep.subr.mxu0 %v461
    %1387 = vmatpush1.msra.mxu0 %v460
    %1388 = vmatprep.subr.mxu0 %v459
    %1389 = vmatpush1.msra.mxu0 %v458
    %1390 = vmatprep.subr.mxu0 %v457
    %1391 = vmatpush1.msra.mxu0 %v456
    %1392 = vmatprep.subr.mxu0 %v455
    %1393 = vmatpush1.msra.mxu0 %v454
    %1394 = vmatprep.subr.mxu0 %v453
    %1395 = vmatpush1.msra.mxu0 %v452
    %1396 = vmatprep.subr.mxu0 0.0
    %1397 = vmatpush2.msra.mxu0 0.0
    %1398 = vmatprep.subr.mxu0 0.0
    %1399 = vmatpush2.msra.mxu0 0.0
    %1400 = vmatprep.subr.mxu0 0.0
    %1401 = vmatpush2.msra.mxu0 0.0
    %1402 = vmatprep.subr.mxu0 0.0
    %1403 = vmatpush2.msra.mxu0 0.0
    %1404 = vmatprep.subr.mxu0 0.0
    %1405 = vmatpush2.msra.mxu0 0.0
    %1406 = vmatprep.subr.mxu0 0.0
    %1407 = vmatpush2.msra.mxu0 0.0
    %1408 = vmatprep.subr.mxu0 0.0
    %1409 = vmatpush2.msra.mxu0 0.0
    %1410 = vmatprep.subr.mxu0 0.0
    %1411 = vmatpush2.msra.mxu0 0.0
    %1412 = vmatprep.subr.mxu0 0.0
    %1413 = vmatpush2.msra.mxu0 0.0
    %1414 = vmatprep.subr.mxu0 0.0
    %1415 = vmatpush2.msra.mxu0 0.0
    %1416 = vmatprep.subr.mxu0 0.0
    %1417 = vmatpush2.msra.mxu0 0.0
    %1418 = vmatprep.subr.mxu0 0.0
    %1419 = vmatpush2.msra.mxu0 0.0
    %1420 = vmatprep.subr.mxu0 0.0
    %1421 = vmatpush2.msra.mxu0 0.0
    %1422 = vmatprep.subr.mxu0 0.0
    %1423 = vmatpush2.msra.mxu0 0.0
    %1424 = vmatprep.subr.mxu0 0.0
    %1425 = vmatpush2.msra.mxu0 0.0
    %1426 = vmatprep.subr.mxu0 0.0
    %1427 = vmatpush2.msra.mxu0 0.0
    %1428 = vmatprep.mubr.f32.mxu0 0.0
    %1429 = vmatmul.mubr.f32.gmra.mxu0 %v1362
    %v1430 = vpop.f32.mrf.mxu0
    %v1431 = vadd.f32 0.0, %v1430
    %v1432 = vpop.f32.mrf.mxu0
    %v1433 = vadd.f32 0.0, %v1432
    %1434 = vdwg.mxu0
    %v1437 = vcombine.low %v1431, %v1433
    %v1439 = vunpack.c.l.s4 1966171168
    %v1440 = vunpack.c.0.s8 %v1439
    %v1441 = vlaneseq
    %v1442 = vshrl.u32 %v1441, 7
    %v1443 = vsub.s32 %v1440, %v1442
    %v1444 = vrot.slane %v1437, %v1443
    %v1446 = vunpack.c.l.s4 1966171168
    %v1447 = vunpack.c.0.s8 %v1446
    %v1448 = vlaneseq
    %v1449 = vshrl.u32 %v1448, 7
    %v1450 = vsub.s32 %v1447, %v1449
    %v1451 = vrot.slane %v1444, %v1450
    %v1453 = vadd.f32 %v1354, %v1451
    %v1454 = vxor.u32 %v1453, 2147483648
    %v1455 = vmul.f32 %v1454, 1.442695
    %v1456 = vpow.pop %v1455
    %v1457 = vadd.f32 %v1456, 1.0
    %v1458 = vrcp.pop %v1457
    %v1459 = vmul.f32 1.0, %v1458
    %v1460 = vtanh.pop %v1453
    %v1461 = vmul.f32 %v1459, %v1345
    %1463 = vrot.lane.b32.xlu0 %v1460, 8
    %v1464 = vpop.permute.xlu0 %1463
    %v1465 = vrot.slane %v1464, 1
    %v1466 = vsel %vm570, %v1464, %v1465
    %v1468 = vmul.f32 %v1459, %v1466
    %1470 = vrot.lane.b32.xlu0 %v1468, 40
    %v1471 = vpop.permute.xlu0 %1470
    %v1473 = vadd.f32 %v1461, %v1471
    %v1474 = vtanh.pop %v1473
    %1476 = vrot.lane.b32.xlu0 %v1474, 40
    %v1477 = vpop.permute.xlu0 %1476
    %v1479 = vmul.f32 %v1459, %v1477
    %v1480 = vmax.f32 %v1352, %v1479
    %1482 = vrot.lane.b32.xlu0 %v462, 80
    %v1483 = vpop.permute.xlu0 %1482
    %v1485 = vmul.f32 %v1480, %v1483
    %v1487 = vlaneseq
    %v1488 = vshrl.u32 %v1487, 7
    %v1489 = vsub.s32 0, %v1488
    %v1490 = vrot.slane %v1485, %v1489
    %1491 = vrot.lane.b32.xlu0 %v1490, 48
    %v1492 = vpop.permute.xlu0 %1491
    %vm1494 = vcmask 319488
    %v1495 = vsel %vm1494, %v1492, 0.0
    %1496 = vadd.xlane.f32.xlu0 %v1495
    %v1497 = vpop.xlane.xlu0 %1496
    %v1498 = vld [vmem:[#allocation3] sm:$0x1]
    %v1499 = vadd.f32 %v1497, %v1498
    %v1500 = vxor.u32 %v1499, 2147483648
    %v1501 = vmul.f32 %v1500, 1.442695
    %v1502 = vpow.pop %v1501
    %v1503 = vadd.f32 %v1502, 1.0
    %v1504 = vrcp.pop %v1503
    %v1505 = vmul.f32 1.0, %v1504
    %vm1506 = vcmask 0
    %1507 = vst.msk [vmem:[#allocation4] sm:$0x1] %vm1506, %v1505
    // Predicated region
    $region26: #{tpu_custom_call.1} parent=1 // pred_check
      _
    $region27: #{tpu_custom_call.1} parent=1 // pred_check_branch
      %1509 = sbr.rel (0) target = $region29
    $region28: #{tpu_custom_call.1} parent=1 // pred_region
      %s1511 = ssub.s32 16, 16
      %1512 = vsyncadd [#allocation5], %s1511
      %s1514 = sshll.u32 [#allocation4], 4
      %s1515 = int_to_ptr.vmem [resolvable:$true] %s1514
      %1517 = dma.vmem_to_hbm [thread:$0]  %s1515, 16, %s6, [#allocation5]
    $region29: #{tpu_custom_call.1} parent=1 // pred_fallthru
      _
    // Predicated region
    $region30: #{tpu_custom_call.1} parent=1 // pred_check
      _
    $region31: #{tpu_custom_call.1} parent=1 // pred_check_branch
      %1519 = sbr.rel (0) target = $region33
    $region32: #{tpu_custom_call.1} parent=1 // pred_region
      %1520 = dma.done [#allocation5], 16
    $region33: #{tpu_custom_call.1} parent=1 // pred_fallthru
      _
    %1521 = vsyncpa [#allocation5], 1

</llo_original>
